<compile_context>
chip_gen: v6e
topology: v6e:2x2x1
jax: 0.10.0
libtpu: 0.0.40
codegen_flags: <defaults>
</compile_context>

<pallas_src>
import jax
import jax.numpy as jnp
from jax.experimental import pallas as pl
from jax.experimental.pallas import tpu as pltpu

EPS = 1e-5      # norm_eps of every BatchNorm1d in the module
LANE = 128      # TPU lane width


def _round_up(x, m):
    return (x + m - 1) // m * m


def _batchnorm(x, gamma, beta):
    """Training-mode BatchNorm1d over the batch axis (single-pass stats)."""
    inv_n = 1.0 / x.shape[0]
    mean = jnp.sum(x, axis=0, keepdims=True) * inv_n
    mean_sq = jnp.sum(x * x, axis=0, keepdims=True) * inv_n
    var = jnp.maximum(mean_sq - mean * mean, 0.0)
    return gamma * (x - mean) * jax.lax.rsqrt(var + EPS) + beta


def _make_kernel(num_views):
    def kernel(*refs):
        x_refs = refs[:num_views]
        (map_w_ref, map_g_ref, map_b_ref,
         w1_ref, w2_ref, w3_ref, w4_ref,
         g1_ref, b1_ref, g2_ref, b2_ref,
         fin_g_ref, fin_b_ref,
         o_ref, z_ref) = refs[num_views:]

        l = pl.program_id(0)

        # ---- first grid step: map_layer = Linear(V*D->D) -> BN -> ReLU ----
        @pl.when(l == 0)
        def _():
            acc = jnp.zeros(z_ref.shape, jnp.float32)
            for v in range(num_views):           # concat-free: sum of per-view dots
                acc += jnp.dot(x_refs[v][...].astype(jnp.bfloat16),
                               map_w_ref[v],
                               preferred_element_type=jnp.float32)
            z0 = _batchnorm(acc, map_g_ref[...], map_b_ref[...])
            z_ref[...] = jnp.maximum(z0, 0.0)

        # ---- fusion block `l` (weights are this layer's tiles) ----
        z = z_ref[...]

        # block1: z + linear2(relu(linear1(norm1(z))))     Dp -> H1p -> Dp
        h = _batchnorm(z, g1_ref[...], b1_ref[...])
        h = jnp.dot(h.astype(jnp.bfloat16), w1_ref[...],
                    preferred_element_type=jnp.float32)
        h = jnp.maximum(h, 0.0)
        z = z + jnp.dot(h.astype(jnp.bfloat16), w2_ref[...],
                        preferred_element_type=jnp.float32)

        # block2: z + linear4(relu(linear3(norm2(z))))     Dp -> H2p -> Dp
        h = _batchnorm(z, g2_ref[...], b2_ref[...])
        h = jnp.dot(h.astype(jnp.bfloat16), w3_ref[...],
                    preferred_element_type=jnp.float32)
        h = jnp.maximum(h, 0.0)
        z = z + jnp.dot(h.astype(jnp.bfloat16), w4_ref[...],
                        preferred_element_type=jnp.float32)
        z_ref[...] = z

        # ---- last grid step: final BatchNorm (use_bn=True) + store ----
        @pl.when(l == pl.num_programs(0) - 1)
        def _():
            o_ref[...] = _batchnorm(z_ref[...], fin_g_ref[...],
                                    fin_b_ref[...]).astype(o_ref.dtype)

    return kernel


def residual_fusion(h_list, packed, hidden_dim):
    """h_list: list of `views` arrays, each (N, hidden_dim); packed: pack_params()."""
    num_views = len(h_list)
    N = h_list[0].shape[0]
    D = hidden_dim
    Dp = _round_up(D, LANE)
    H1p = _round_up(2 * D, LANE)
    H2p = _round_up(max(D // 2, 1), LANE)
    L = packed["w1"].shape[0]

    # lane-dense padding of the activations (zero columns beyond D)
    x_views = [jnp.pad(h, ((0, 0), (0, Dp - D))) if Dp != D else h
               for h in h_list]

    const2 = lambda l: (0, 0)
    const3 = lambda l: (0, 0, 0)
    per_layer3 = lambda l: (l, 0, 0)

    in_specs = (
        [pl.BlockSpec((N, Dp), const2)] * num_views             # views
        + [pl.BlockSpec((num_views, Dp, Dp), const3),           # map_w (per view)
           pl.BlockSpec((1, Dp), const2),                       # map gamma
           pl.BlockSpec((1, Dp), const2),                       # map beta
           pl.BlockSpec((None, Dp, H1p), per_layer3),           # w1  (per layer)
           pl.BlockSpec((None, H1p, Dp), per_layer3),           # w2
           pl.BlockSpec((None, Dp, H2p), per_layer3),           # w3
           pl.BlockSpec((None, H2p, Dp), per_layer3),           # w4
           pl.BlockSpec((None, 1, Dp), per_layer3),             # g1
           pl.BlockSpec((None, 1, Dp), per_layer3),             # b1
           pl.BlockSpec((None, 1, Dp), per_layer3),             # g2
           pl.BlockSpec((None, 1, Dp), per_layer3),             # b2
           pl.BlockSpec((1, Dp), const2),                       # final gamma
           pl.BlockSpec((1, Dp), const2)])                      # final beta
    out_spec = pl.BlockSpec((N, Dp), const2)

    # VMEM budget: double-buffered per-layer bf16 weights + resident activations.
    per_layer_w_bytes = 2 * (Dp * H1p + H1p * Dp + Dp * H2p + H2p * Dp)  # bf16
    resident_bytes = (4 * N * Dp * (num_views + 2)         # views + z + out (f32)
                      + 2 * num_views * Dp * Dp             # map_w (bf16)
                      + 4 * 16 * Dp)                        # gammas/betas
    vmem_bytes = int(min(max(2 * per_layer_w_bytes + resident_bytes + (1 << 20),
                             4 << 20), 96 << 20))

    flops = 2 * N * Dp * (num_views * Dp + L * 2 * (H1p + H2p))
    bytes_accessed = (4 * N * Dp * (num_views + 1)
                      + 2 * (num_views * Dp * Dp + 2 * L * Dp * (H1p + H2p))
                      + 4 * (4 * L + 4) * Dp)

    out_padded = pl.pallas_call(
        _make_kernel(num_views),
        out_shape=jax.ShapeDtypeStruct((N, Dp), jnp.float32),
        grid_spec=pltpu.PrefetchScalarGridSpec(
            num_scalar_prefetch=0,
            grid=(L,),
            in_specs=in_specs,
            out_specs=out_spec,
            scratch_shapes=[pltpu.VMEM((N, Dp), jnp.float32)],   # resident z
        ),
        compiler_params=pltpu.CompilerParams(
            dimension_semantics=("arbitrary",),
            vmem_limit_bytes=vmem_bytes),
        cost_estimate=pl.CostEstimate(
            flops=flops,
            transcendentals=(2 + 2 * L) * Dp,
            bytes_accessed=bytes_accessed),
    )(*x_views,
      packed["map_w"], packed["map_g"], packed["map_b"],
      packed["w1"], packed["w2"], packed["w3"], packed["w4"],
      packed["g1"], packed["b1"], packed["g2"], packed["b2"],
      packed["fin_g"], packed["fin_b"])

    return out_padded[:, :D]


# ---------------------------------------------------------------------------
# Parameters (logical f32 shapes mirroring the PyTorch module) + packing.
# ---------------------------------------------------------------------------
def init_params(key, views, hidden, num_layers):
    """The PyTorch module deep-copies ONE _FusionBlock num_layers times, so
    all layers start from identical weights; replicate via tiling."""
    D = hidden
    ks = jax.random.split(key, 5)

    def w(k, shape):
        return jax.random.normal(k, shape, jnp.float32) * 0.05

    map_w = w(ks[0], (views * D, D))                               # Linear(V*D -> D)
    w1 = jnp.tile(w(ks[1], (1, D, 2 * D)), (num_layers, 1, 1))     # linear1
    w2 = jnp.tile(w(ks[2], (1, 2 * D, D)), (num_layers, 1, 1))     # linear2
    w3 = jnp.tile(w(ks[3], (1, D, D // 2)), (num_layers, 1, 1))    # linear3
    w4 = jnp.tile(w(ks[4], (1, D // 2, D)), (num_layers, 1, 1))    # linear4

    ones_l = jnp.ones((num_layers, 1, D), jnp.float32)
    zeros_l = jnp.zeros((num_layers, 1, D), jnp.float32)
    return dict(
        map_w=map_w,
        map_g=jnp.ones((1, D), jnp.float32), map_b=jnp.zeros((1, D), jnp.float32),
        w1=w1, w2=w2, w3=w3, w4=w4,
        g1=ones_l, b1=zeros_l, g2=ones_l, b2=zeros_l,
        fin_g=jnp.ones((1, D), jnp.float32), fin_b=jnp.zeros((1, D), jnp.float32),
    )


def pack_params(params, views, hidden):
    """Pad all feature dims to lane-dense multiples of 128, split the map
    weight per view, and store matmul weights in bf16 (f32 accumulation in
    the kernel). Zero padding keeps padded columns exactly zero end-to-end."""
    D = hidden
    Dp = _round_up(D, LANE)
    H1p = _round_up(2 * D, LANE)
    H2p = _round_up(max(D // 2, 1), LANE)

    def pad2(a, r, c):
        return jnp.pad(a, ((0, r - a.shape[0]), (0, c - a.shape[1])))

    def pad3(a, r, c):
        return jnp.pad(a, ((0, 0), (0, r - a.shape[1]), (0, c - a.shape[2])))

    bf16 = jnp.bfloat16
    map_w = params["map_w"].reshape(views, D, D)
    map_w = jnp.pad(map_w, ((0, 0), (0, Dp - D), (0, Dp - D)))

    return dict(
        map_w=map_w.astype(bf16),
        map_g=pad2(params["map_g"], 1, Dp), map_b=pad2(params["map_b"], 1, Dp),
        w1=pad3(params["w1"], Dp, H1p).astype(bf16),
        w2=pad3(params["w2"], H1p, Dp).astype(bf16),
        w3=pad3(params["w3"], Dp, H2p).astype(bf16),
        w4=pad3(params["w4"], H2p, Dp).astype(bf16),
        g1=pad3(params["g1"], 1, Dp), b1=pad3(params["b1"], 1, Dp),
        g2=pad3(params["g2"], 1, Dp), b2=pad3(params["b2"], 1, Dp),
        fin_g=pad2(params["fin_g"], 1, Dp), fin_b=pad2(params["fin_b"], 1, Dp),
    )


# ---------------------------------------------------------------------------
# Pure-JAX f32 reference (two-pass BN) for validation.
# ---------------------------------------------------------------------------
def _bn_ref(x, gamma, beta):
    mean = jnp.mean(x, axis=0, keepdims=True)
    var = jnp.mean((x - mean) ** 2, axis=0, keepdims=True)
    return gamma * (x - mean) * jax.lax.rsqrt(var + EPS) + beta


def residual_fusion_reference(h_list, params):
    x = jnp.concatenate(h_list, axis=-1)
    z = jnp.maximum(_bn_ref(x @ params["map_w"], params["map_g"], params["map_b"]), 0.0)
    for l in range(params["w1"].shape[0]):
        h = jnp.maximum(_bn_ref(z, params["g1"][l], params["b1"][l]) @ params["w1"][l], 0.0)
        z = z + h @ params["w2"][l]
        h = jnp.maximum(_bn_ref(z, params["g2"][l], params["b2"][l]) @ params["w3"][l], 0.0)
        z = z + h @ params["w4"][l]
    return _bn_ref(z, params["fin_g"], params["fin_b"])


if __name__ == "__main__":
    key = jax.random.PRNGKey(0)
    views, hidden, num_layers, batch = 2, 32, 2, 8

    k_h, k_p = jax.random.split(key)
    h_keys = jax.random.split(k_h, views)
    h = [jax.random.normal(h_keys[v], (batch, hidden), jnp.float32)
         for v in range(views)]

    params = init_params(k_p, views, hidden, num_layers)
    packed = pack_params(params, views, hidden)

    out = residual_fusion(h, packed, hidden)
    jax.block_until_ready(out)

    ref = residual_fusion_reference(h, params)
    err = float(jnp.max(jnp.abs(out - ref)))
    assert out.shape == (batch, hidden) and out.dtype == jnp.float32
    assert err < 0.25, f"max abs error vs f32 reference too large: {err}"
    print("KERNEL_OK")
</pallas_src>

<mosaic_0001>
module attributes {stable_mosaic.version = 11 : i64} {
  func.func @kernel(%arg0: i32, %arg1: memref<8x128xf32, #tpu.memory_space<vmem>>, %arg2: memref<8x128xf32, #tpu.memory_space<vmem>>, %arg3: memref<2x128x128xbf16, #tpu.memory_space<vmem>>, %arg4: memref<1x128xf32, #tpu.memory_space<vmem>>, %arg5: memref<1x128xf32, #tpu.memory_space<vmem>>, %arg6: memref<1x128x128xbf16, #tpu.memory_space<vmem>>, %arg7: memref<1x128x128xbf16, #tpu.memory_space<vmem>>, %arg8: memref<1x128x128xbf16, #tpu.memory_space<vmem>>, %arg9: memref<1x128x128xbf16, #tpu.memory_space<vmem>>, %arg10: memref<1x1x128xf32, #tpu.memory_space<vmem>>, %arg11: memref<1x1x128xf32, #tpu.memory_space<vmem>>, %arg12: memref<1x1x128xf32, #tpu.memory_space<vmem>>, %arg13: memref<1x1x128xf32, #tpu.memory_space<vmem>>, %arg14: memref<1x128xf32, #tpu.memory_space<vmem>>, %arg15: memref<1x128xf32, #tpu.memory_space<vmem>>, %arg16: memref<8x128xf32, #tpu.memory_space<vmem>>, %arg17: memref<8x128xf32, #tpu.memory_space<vmem>>) attributes {dimension_semantics = [#tpu.dimension_semantics<arbitrary>], iteration_bounds = array<i64: 2>, scalar_prefetch = 0 : i64, scratch_operands = 1 : i64, tpu.core_type = #tpu.core_type<tc>, window_params = [{pipeline_mode = #tpu.pipeline_mode<synchronous>, transform_indices = @transform_0, window_bounds = array<i64: 8, 128>}, {pipeline_mode = #tpu.pipeline_mode<synchronous>, transform_indices = @transform_1, window_bounds = array<i64: 8, 128>}, {pipeline_mode = #tpu.pipeline_mode<synchronous>, transform_indices = @transform_2, window_bounds = array<i64: 2, 128, 128>}, {pipeline_mode = #tpu.pipeline_mode<synchronous>, transform_indices = @transform_3, window_bounds = array<i64: 1, 128>}, {pipeline_mode = #tpu.pipeline_mode<synchronous>, transform_indices = @transform_4, window_bounds = array<i64: 1, 128>}, {transform_indices = @transform_5, window_bounds = array<i64: 1, 128, 128>}, {transform_indices = @transform_6, window_bounds = array<i64: 1, 128, 128>}, {transform_indices = @transform_7, window_bounds = array<i64: 1, 128, 128>}, {transform_indices = @transform_8, window_bounds = array<i64: 1, 128, 128>}, {transform_indices = @transform_9, window_bounds = array<i64: 1, 1, 128>}, {transform_indices = @transform_10, window_bounds = array<i64: 1, 1, 128>}, {transform_indices = @transform_11, window_bounds = array<i64: 1, 1, 128>}, {transform_indices = @transform_12, window_bounds = array<i64: 1, 1, 128>}, {pipeline_mode = #tpu.pipeline_mode<synchronous>, transform_indices = @transform_13, window_bounds = array<i64: 1, 128>}, {pipeline_mode = #tpu.pipeline_mode<synchronous>, transform_indices = @transform_14, window_bounds = array<i64: 1, 128>}, {pipeline_mode = #tpu.pipeline_mode<synchronous>, transform_indices = @transform_15, window_bounds = array<i64: 8, 128>}]} {
    %c0_i32 = arith.constant 0 : i32
    %0 = arith.cmpi eq, %arg0, %c0_i32 : i32
    %1 = arith.extui %0 : i1 to i32
    %c0_i32_0 = arith.constant 0 : i32
    %2 = arith.cmpi ne, %1, %c0_i32_0 : i32
    scf.if %2 {
      %cst_46 = arith.constant 0.000000e+00 : f32
      %86 = vector.broadcast %cst_46 : f32 to vector<8x128xf32>
      %c0_47 = arith.constant 0 : index
      %c0_48 = arith.constant 0 : index
      %87 = vector.load %arg1[%c0_47, %c0_48] : memref<8x128xf32, #tpu.memory_space<vmem>>, vector<8x128xf32>
      %88 = arith.truncf %87 : vector<8x128xf32> to vector<8x128xbf16>
      %c0_49 = arith.constant 0 : index
      %c0_50 = arith.constant 0 : index
      %c0_51 = arith.constant 0 : index
      %89 = vector.load %arg3[%c0_49, %c0_50, %c0_51] : memref<2x128x128xbf16, #tpu.memory_space<vmem>>, vector<1x128x128xbf16>
      %90 = vector.shape_cast %89 : vector<1x128x128xbf16> to vector<128x128xbf16>
      %cst_52 = arith.constant dense<0.000000e+00> : vector<8x128xf32>
      %91 = tpu.matmul %88, %90, %cst_52 {dimension_numbers = #tpu.dot_dimension_numbers<[1], [0], [0], [1], [0, 0, 1, 1], [], []>} : vector<8x128xbf16>, vector<128x128xbf16>, vector<8x128xf32> -> vector<8x128xf32>
      %92 = arith.addf %86, %91 : vector<8x128xf32>
      %c0_53 = arith.constant 0 : index
      %c0_54 = arith.constant 0 : index
      %93 = vector.load %arg2[%c0_53, %c0_54] : memref<8x128xf32, #tpu.memory_space<vmem>>, vector<8x128xf32>
      %94 = arith.truncf %93 : vector<8x128xf32> to vector<8x128xbf16>
      %c1 = arith.constant 1 : index
      %c0_55 = arith.constant 0 : index
      %c0_56 = arith.constant 0 : index
      %95 = vector.load %arg3[%c1, %c0_55, %c0_56] : memref<2x128x128xbf16, #tpu.memory_space<vmem>>, vector<1x128x128xbf16>
      %96 = vector.shape_cast %95 : vector<1x128x128xbf16> to vector<128x128xbf16>
      %cst_57 = arith.constant dense<0.000000e+00> : vector<8x128xf32>
      %97 = tpu.matmul %94, %96, %cst_57 {dimension_numbers = #tpu.dot_dimension_numbers<[1], [0], [0], [1], [0, 0, 1, 1], [], []>} : vector<8x128xbf16>, vector<128x128xbf16>, vector<8x128xf32> -> vector<8x128xf32>
      %98 = arith.addf %92, %97 : vector<8x128xf32>
      %c0_58 = arith.constant 0 : index
      %c0_59 = arith.constant 0 : index
      %99 = vector.load %arg4[%c0_58, %c0_59] : memref<1x128xf32, #tpu.memory_space<vmem>>, vector<1x128xf32>
      %c0_60 = arith.constant 0 : index
      %c0_61 = arith.constant 0 : index
      %100 = vector.load %arg5[%c0_60, %c0_61] : memref<1x128xf32, #tpu.memory_space<vmem>>, vector<1x128xf32>
      %cst_62 = arith.constant dense<0.000000e+00> : vector<128xf32>
      %101 = vector.multi_reduction <add>, %98, %cst_62 [0] : vector<8x128xf32> to vector<128xf32>
      %102 = vector.shape_cast %101 : vector<128xf32> to vector<1x128xf32>
      %cst_63 = arith.constant 1.250000e-01 : f32
      %103 = vector.broadcast %cst_63 : f32 to vector<1x128xf32>
      %104 = arith.mulf %102, %103 : vector<1x128xf32>
      %105 = arith.mulf %98, %98 : vector<8x128xf32>
      %cst_64 = arith.constant dense<0.000000e+00> : vector<128xf32>
      %106 = vector.multi_reduction <add>, %105, %cst_64 [0] : vector<8x128xf32> to vector<128xf32>
      %107 = vector.shape_cast %106 : vector<128xf32> to vector<1x128xf32>
      %cst_65 = arith.constant 1.250000e-01 : f32
      %108 = vector.broadcast %cst_65 : f32 to vector<1x128xf32>
      %109 = arith.mulf %107, %108 : vector<1x128xf32>
      %110 = arith.mulf %104, %104 : vector<1x128xf32>
      %111 = arith.subf %109, %110 : vector<1x128xf32>
      %cst_66 = arith.constant 0.000000e+00 : f32
      %112 = vector.broadcast %cst_66 : f32 to vector<1x128xf32>
      %113 = arith.maximumf %111, %112 : vector<1x128xf32>
      %114 = vector.broadcast %104 : vector<1x128xf32> to vector<8x128xf32>
      %115 = arith.subf %98, %114 : vector<8x128xf32>
      %116 = vector.broadcast %99 : vector<1x128xf32> to vector<8x128xf32>
      %117 = arith.mulf %116, %115 : vector<8x128xf32>
      %cst_67 = arith.constant 9.99999974E-6 : f32
      %118 = vector.broadcast %cst_67 : f32 to vector<1x128xf32>
      %119 = arith.addf %113, %118 : vector<1x128xf32>
      %120 = math.rsqrt %119 : vector<1x128xf32>
      %121 = vector.broadcast %120 : vector<1x128xf32> to vector<8x128xf32>
      %122 = arith.mulf %117, %121 : vector<8x128xf32>
      %123 = vector.broadcast %100 : vector<1x128xf32> to vector<8x128xf32>
      %124 = arith.addf %122, %123 : vector<8x128xf32>
      %cst_68 = arith.constant 0.000000e+00 : f32
      %125 = vector.broadcast %cst_68 : f32 to vector<8x128xf32>
      %126 = arith.maximumf %124, %125 : vector<8x128xf32>
      %c0_69 = arith.constant 0 : index
      %c0_70 = arith.constant 0 : index
      %127 = vector.load %arg17[%c0_69, %c0_70] : memref<8x128xf32, #tpu.memory_space<vmem>>, vector<8x128xf32>
      tpu.vector_store %arg17[%c0_69, %c0_70], %126 {strides = array<i32>} : memref<8x128xf32, #tpu.memory_space<vmem>>, vector<8x128xf32>,
    } else {
    }
    %c0 = arith.constant 0 : index
    %c0_1 = arith.constant 0 : index
    %3 = vector.load %arg17[%c0, %c0_1] : memref<8x128xf32, #tpu.memory_space<vmem>>, vector<8x128xf32>
    %c0_2 = arith.constant 0 : index
    %c0_3 = arith.constant 0 : index
    %c0_4 = arith.constant 0 : index
    %4 = vector.load %arg10[%c0_2, %c0_3, %c0_4] : memref<1x1x128xf32, #tpu.memory_space<vmem>>, vector<1x1x128xf32>
    %5 = vector.shape_cast %4 : vector<1x1x128xf32> to vector<1x128xf32>
    %c0_5 = arith.constant 0 : index
    %c0_6 = arith.constant 0 : index
    %c0_7 = arith.constant 0 : index
    %6 = vector.load %arg11[%c0_5, %c0_6, %c0_7] : memref<1x1x128xf32, #tpu.memory_space<vmem>>, vector<1x1x128xf32>
    %7 = vector.shape_cast %6 : vector<1x1x128xf32> to vector<1x128xf32>
    %cst = arith.constant dense<0.000000e+00> : vector<128xf32>
    %8 = vector.multi_reduction <add>, %3, %cst [0] : vector<8x128xf32> to vector<128xf32>
    %9 = vector.shape_cast %8 : vector<128xf32> to vector<1x128xf32>
    %cst_8 = arith.constant 1.250000e-01 : f32
    %10 = vector.broadcast %cst_8 : f32 to vector<1x128xf32>
    %11 = arith.mulf %9, %10 : vector<1x128xf32>
    %12 = arith.mulf %3, %3 : vector<8x128xf32>
    %cst_9 = arith.constant dense<0.000000e+00> : vector<128xf32>
    %13 = vector.multi_reduction <add>, %12, %cst_9 [0] : vector<8x128xf32> to vector<128xf32>
    %14 = vector.shape_cast %13 : vector<128xf32> to vector<1x128xf32>
    %cst_10 = arith.constant 1.250000e-01 : f32
    %15 = vector.broadcast %cst_10 : f32 to vector<1x128xf32>
    %16 = arith.mulf %14, %15 : vector<1x128xf32>
    %17 = arith.mulf %11, %11 : vector<1x128xf32>
    %18 = arith.subf %16, %17 : vector<1x128xf32>
    %cst_11 = arith.constant 0.000000e+00 : f32
    %19 = vector.broadcast %cst_11 : f32 to vector<1x128xf32>
    %20 = arith.maximumf %18, %19 : vector<1x128xf32>
    %21 = vector.broadcast %11 : vector<1x128xf32> to vector<8x128xf32>
    %22 = arith.subf %3, %21 : vector<8x128xf32>
    %23 = vector.broadcast %5 : vector<1x128xf32> to vector<8x128xf32>
    %24 = arith.mulf %23, %22 : vector<8x128xf32>
    %cst_12 = arith.constant 9.99999974E-6 : f32
    %25 = vector.broadcast %cst_12 : f32 to vector<1x128xf32>
    %26 = arith.addf %20, %25 : vector<1x128xf32>
    %27 = math.rsqrt %26 : vector<1x128xf32>
    %28 = vector.broadcast %27 : vector<1x128xf32> to vector<8x128xf32>
    %29 = arith.mulf %24, %28 : vector<8x128xf32>
    %30 = vector.broadcast %7 : vector<1x128xf32> to vector<8x128xf32>
    %31 = arith.addf %29, %30 : vector<8x128xf32>
    %32 = arith.truncf %31 : vector<8x128xf32> to vector<8x128xbf16>
    %c0_13 = arith.constant 0 : index
    %c0_14 = arith.constant 0 : index
    %c0_15 = arith.constant 0 : index
    %33 = vector.load %arg6[%c0_13, %c0_14, %c0_15] : memref<1x128x128xbf16, #tpu.memory_space<vmem>>, vector<1x128x128xbf16>
    %34 = vector.shape_cast %33 : vector<1x128x128xbf16> to vector<128x128xbf16>
    %cst_16 = arith.constant dense<0.000000e+00> : vector<8x128xf32>
    %35 = tpu.matmul %32, %34, %cst_16 {dimension_numbers = #tpu.dot_dimension_numbers<[1], [0], [0], [1], [0, 0, 1, 1], [], []>} : vector<8x128xbf16>, vector<128x128xbf16>, vector<8x128xf32> -> vector<8x128xf32>
    %cst_17 = arith.constant 0.000000e+00 : f32
    %36 = vector.broadcast %cst_17 : f32 to vector<8x128xf32>
    %37 = arith.maximumf %35, %36 : vector<8x128xf32>
    %38 = arith.truncf %37 : vector<8x128xf32> to vector<8x128xbf16>
    %c0_18 = arith.constant 0 : index
    %c0_19 = arith.constant 0 : index
    %c0_20 = arith.constant 0 : index
    %39 = vector.load %arg7[%c0_18, %c0_19, %c0_20] : memref<1x128x128xbf16, #tpu.memory_space<vmem>>, vector<1x128x128xbf16>
    %40 = vector.shape_cast %39 : vector<1x128x128xbf16> to vector<128x128xbf16>
    %cst_21 = arith.constant dense<0.000000e+00> : vector<8x128xf32>
    %41 = tpu.matmul %38, %40, %cst_21 {dimension_numbers = #tpu.dot_dimension_numbers<[1], [0], [0], [1], [0, 0, 1, 1], [], []>} : vector<8x128xbf16>, vector<128x128xbf16>, vector<8x128xf32> -> vector<8x128xf32>
    %42 = arith.addf %3, %41 : vector<8x128xf32>
    %c0_22 = arith.constant 0 : index
    %c0_23 = arith.constant 0 : index
    %c0_24 = arith.constant 0 : index
    %43 = vector.load %arg12[%c0_22, %c0_23, %c0_24] : memref<1x1x128xf32, #tpu.memory_space<vmem>>, vector<1x1x128xf32>
    %44 = vector.shape_cast %43 : vector<1x1x128xf32> to vector<1x128xf32>
    %c0_25 = arith.constant 0 : index
    %c0_26 = arith.constant 0 : index
    %c0_27 = arith.constant 0 : index
    %45 = vector.load %arg13[%c0_25, %c0_26, %c0_27] : memref<1x1x128xf32, #tpu.memory_space<vmem>>, vector<1x1x128xf32>
    %46 = vector.shape_cast %45 : vector<1x1x128xf32> to vector<1x128xf32>
    %cst_28 = arith.constant dense<0.000000e+00> : vector<128xf32>
    %47 = vector.multi_reduction <add>, %42, %cst_28 [0] : vector<8x128xf32> to vector<128xf32>
    %48 = vector.shape_cast %47 : vector<128xf32> to vector<1x128xf32>
    %cst_29 = arith.constant 1.250000e-01 : f32
    %49 = vector.broadcast %cst_29 : f32 to vector<1x128xf32>
    %50 = arith.mulf %48, %49 : vector<1x128xf32>
    %51 = arith.mulf %42, %42 : vector<8x128xf32>
    %cst_30 = arith.constant dense<0.000000e+00> : vector<128xf32>
    %52 = vector.multi_reduction <add>, %51, %cst_30 [0] : vector<8x128xf32> to vector<128xf32>
    %53 = vector.shape_cast %52 : vector<128xf32> to vector<1x128xf32>
    %cst_31 = arith.constant 1.250000e-01 : f32
    %54 = vector.broadcast %cst_31 : f32 to vector<1x128xf32>
    %55 = arith.mulf %53, %54 : vector<1x128xf32>
    %56 = arith.mulf %50, %50 : vector<1x128xf32>
    %57 = arith.subf %55, %56 : vector<1x128xf32>
    %cst_32 = arith.constant 0.000000e+00 : f32
    %58 = vector.broadcast %cst_32 : f32 to vector<1x128xf32>
    %59 = arith.maximumf %57, %58 : vector<1x128xf32>
    %60 = vector.broadcast %50 : vector<1x128xf32> to vector<8x128xf32>
    %61 = arith.subf %42, %60 : vector<8x128xf32>
    %62 = vector.broadcast %44 : vector<1x128xf32> to vector<8x128xf32>
    %63 = arith.mulf %62, %61 : vector<8x128xf32>
    %cst_33 = arith.constant 9.99999974E-6 : f32
    %64 = vector.broadcast %cst_33 : f32 to vector<1x128xf32>
    %65 = arith.addf %59, %64 : vector<1x128xf32>
    %66 = math.rsqrt %65 : vector<1x128xf32>
    %67 = vector.broadcast %66 : vector<1x128xf32> to vector<8x128xf32>
    %68 = arith.mulf %63, %67 : vector<8x128xf32>
    %69 = vector.broadcast %46 : vector<1x128xf32> to vector<8x128xf32>
    %70 = arith.addf %68, %69 : vector<8x128xf32>
    %71 = arith.truncf %70 : vector<8x128xf32> to vector<8x128xbf16>
    %c0_34 = arith.constant 0 : index
    %c0_35 = arith.constant 0 : index
    %c0_36 = arith.constant 0 : index
    %72 = vector.load %arg8[%c0_34, %c0_35, %c0_36] : memref<1x128x128xbf16, #tpu.memory_space<vmem>>, vector<1x128x128xbf16>
    %73 = vector.shape_cast %72 : vector<1x128x128xbf16> to vector<128x128xbf16>
    %cst_37 = arith.constant dense<0.000000e+00> : vector<8x128xf32>
    %74 = tpu.matmul %71, %73, %cst_37 {dimension_numbers = #tpu.dot_dimension_numbers<[1], [0], [0], [1], [0, 0, 1, 1], [], []>} : vector<8x128xbf16>, vector<128x128xbf16>, vector<8x128xf32> -> vector<8x128xf32>
    %cst_38 = arith.constant 0.000000e+00 : f32
    %75 = vector.broadcast %cst_38 : f32 to vector<8x128xf32>
    %76 = arith.maximumf %74, %75 : vector<8x128xf32>
    %77 = arith.truncf %76 : vector<8x128xf32> to vector<8x128xbf16>
    %c0_39 = arith.constant 0 : index
    %c0_40 = arith.constant 0 : index
    %c0_41 = arith.constant 0 : index
    %78 = vector.load %arg9[%c0_39, %c0_40, %c0_41] : memref<1x128x128xbf16, #tpu.memory_space<vmem>>, vector<1x128x128xbf16>
    %79 = vector.shape_cast %78 : vector<1x128x128xbf16> to vector<128x128xbf16>
    %cst_42 = arith.constant dense<0.000000e+00> : vector<8x128xf32>
    %80 = tpu.matmul %77, %79, %cst_42 {dimension_numbers = #tpu.dot_dimension_numbers<[1], [0], [0], [1], [0, 0, 1, 1], [], []>} : vector<8x128xbf16>, vector<128x128xbf16>, vector<8x128xf32> -> vector<8x128xf32>
    %81 = arith.addf %42, %80 : vector<8x128xf32>
    %c0_43 = arith.constant 0 : index
    %c0_44 = arith.constant 0 : index
    %82 = vector.load %arg17[%c0_43, %c0_44] : memref<8x128xf32, #tpu.memory_space<vmem>>, vector<8x128xf32>
    tpu.vector_store %arg17[%c0_43, %c0_44], %81 {strides = array<i32>} : memref<8x128xf32, #tpu.memory_space<vmem>>, vector<8x128xf32>,
    %c1_i32 = arith.constant 1 : i32
    %83 = arith.cmpi eq, %arg0, %c1_i32 : i32
    %84 = arith.extui %83 : i1 to i32
    %c0_i32_45 = arith.constant 0 : i32
    %85 = arith.cmpi ne, %84, %c0_i32_45 : i32
    scf.if %85 {
      %c0_46 = arith.constant 0 : index
      %c0_47 = arith.constant 0 : index
      %86 = vector.load %arg17[%c0_46, %c0_47] : memref<8x128xf32, #tpu.memory_space<vmem>>, vector<8x128xf32>
      %c0_48 = arith.constant 0 : index
      %c0_49 = arith.constant 0 : index
      %87 = vector.load %arg14[%c0_48, %c0_49] : memref<1x128xf32, #tpu.memory_space<vmem>>, vector<1x128xf32>
      %c0_50 = arith.constant 0 : index
      %c0_51 = arith.constant 0 : index
      %88 = vector.load %arg15[%c0_50, %c0_51] : memref<1x128xf32, #tpu.memory_space<vmem>>, vector<1x128xf32>
      %cst_52 = arith.constant dense<0.000000e+00> : vector<128xf32>
      %89 = vector.multi_reduction <add>, %86, %cst_52 [0] : vector<8x128xf32> to vector<128xf32>
      %90 = vector.shape_cast %89 : vector<128xf32> to vector<1x128xf32>
      %cst_53 = arith.constant 1.250000e-01 : f32
      %91 = vector.broadcast %cst_53 : f32 to vector<1x128xf32>
      %92 = arith.mulf %90, %91 : vector<1x128xf32>
      %93 = arith.mulf %86, %86 : vector<8x128xf32>
      %cst_54 = arith.constant dense<0.000000e+00> : vector<128xf32>
      %94 = vector.multi_reduction <add>, %93, %cst_54 [0] : vector<8x128xf32> to vector<128xf32>
      %95 = vector.shape_cast %94 : vector<128xf32> to vector<1x128xf32>
      %cst_55 = arith.constant 1.250000e-01 : f32
      %96 = vector.broadcast %cst_55 : f32 to vector<1x128xf32>
      %97 = arith.mulf %95, %96 : vector<1x128xf32>
      %98 = arith.mulf %92, %92 : vector<1x128xf32>
      %99 = arith.subf %97, %98 : vector<1x128xf32>
      %cst_56 = arith.constant 0.000000e+00 : f32
      %100 = vector.broadcast %cst_56 : f32 to vector<1x128xf32>
      %101 = arith.maximumf %99, %100 : vector<1x128xf32>
      %102 = vector.broadcast %92 : vector<1x128xf32> to vector<8x128xf32>
      %103 = arith.subf %86, %102 : vector<8x128xf32>
      %104 = vector.broadcast %87 : vector<1x128xf32> to vector<8x128xf32>
      %105 = arith.mulf %104, %103 : vector<8x128xf32>
      %cst_57 = arith.constant 9.99999974E-6 : f32
      %106 = vector.broadcast %cst_57 : f32 to vector<1x128xf32>
      %107 = arith.addf %101, %106 : vector<1x128xf32>
      %108 = math.rsqrt %107 : vector<1x128xf32>
      %109 = vector.broadcast %108 : vector<1x128xf32> to vector<8x128xf32>
      %110 = arith.mulf %105, %109 : vector<8x128xf32>
      %111 = vector.broadcast %88 : vector<1x128xf32> to vector<8x128xf32>
      %112 = arith.addf %110, %111 : vector<8x128xf32>
      %c0_58 = arith.constant 0 : index
      %c0_59 = arith.constant 0 : index
      %113 = vector.load %arg16[%c0_58, %c0_59] : memref<8x128xf32, #tpu.memory_space<vmem>>, vector<8x128xf32>
      tpu.vector_store %arg16[%c0_58, %c0_59], %112 {strides = array<i32>} : memref<8x128xf32, #tpu.memory_space<vmem>>, vector<8x128xf32>,
    } else {
    }
    return
  }
  func.func @transform_0(%arg0: i32) -> (i32, i32) {
    %c0_i32 = arith.constant 0 : i32
    %c0_i32_0 = arith.constant 0 : i32
    %c0_i32_1 = arith.constant 0 : i32
    return %c0_i32, %c0_i32_0 : i32, i32
  }
  func.func @transform_1(%arg0: i32) -> (i32, i32) {
    %c0_i32 = arith.constant 0 : i32
    %c0_i32_0 = arith.constant 0 : i32
    %c0_i32_1 = arith.constant 0 : i32
    return %c0_i32, %c0_i32_0 : i32, i32
  }
  func.func @transform_2(%arg0: i32) -> (i32, i32, i32) {
    %c0_i32 = arith.constant 0 : i32
    %c0_i32_0 = arith.constant 0 : i32
    %c0_i32_1 = arith.constant 0 : i32
    %c0_i32_2 = arith.constant 0 : i32
    return %c0_i32, %c0_i32_0, %c0_i32_1 : i32, i32, i32
  }
  func.func @transform_3(%arg0: i32) -> (i32, i32) {
    %c0_i32 = arith.constant 0 : i32
    %c0_i32_0 = arith.constant 0 : i32
    %c0_i32_1 = arith.constant 0 : i32
    return %c0_i32, %c0_i32_0 : i32, i32
  }
  func.func @transform_4(%arg0: i32) -> (i32, i32) {
    %c0_i32 = arith.constant 0 : i32
    %c0_i32_0 = arith.constant 0 : i32
    %c0_i32_1 = arith.constant 0 : i32
    return %c0_i32, %c0_i32_0 : i32, i32
  }
  func.func @transform_5(%arg0: i32) -> (i32, i32, i32) {
    %c0_i32 = arith.constant 0 : i32
    %c0_i32_0 = arith.constant 0 : i32
    %c0_i32_1 = arith.constant 0 : i32
    return %arg0, %c0_i32, %c0_i32_0 : i32, i32, i32
  }
  func.func @transform_6(%arg0: i32) -> (i32, i32, i32) {
    %c0_i32 = arith.constant 0 : i32
    %c0_i32_0 = arith.constant 0 : i32
    %c0_i32_1 = arith.constant 0 : i32
    return %arg0, %c0_i32, %c0_i32_0 : i32, i32, i32
  }
  func.func @transform_7(%arg0: i32) -> (i32, i32, i32) {
    %c0_i32 = arith.constant 0 : i32
    %c0_i32_0 = arith.constant 0 : i32
    %c0_i32_1 = arith.constant 0 : i32
    return %arg0, %c0_i32, %c0_i32_0 : i32, i32, i32
  }
  func.func @transform_8(%arg0: i32) -> (i32, i32, i32) {
    %c0_i32 = arith.constant 0 : i32
    %c0_i32_0 = arith.constant 0 : i32
    %c0_i32_1 = arith.constant 0 : i32
    return %arg0, %c0_i32, %c0_i32_0 : i32, i32, i32
  }
  func.func @transform_9(%arg0: i32) -> (i32, i32, i32) {
    %c0_i32 = arith.constant 0 : i32
    %c0_i32_0 = arith.constant 0 : i32
    %c0_i32_1 = arith.constant 0 : i32
    return %arg0, %c0_i32, %c0_i32_0 : i32, i32, i32
  }
  func.func @transform_10(%arg0: i32) -> (i32, i32, i32) {
    %c0_i32 = arith.constant 0 : i32
    %c0_i32_0 = arith.constant 0 : i32
    %c0_i32_1 = arith.constant 0 : i32
    return %arg0, %c0_i32, %c0_i32_0 : i32, i32, i32
  }
  func.func @transform_11(%arg0: i32) -> (i32, i32, i32) {
    %c0_i32 = arith.constant 0 : i32
    %c0_i32_0 = arith.constant 0 : i32
    %c0_i32_1 = arith.constant 0 : i32
    return %arg0, %c0_i32, %c0_i32_0 : i32, i32, i32
  }
  func.func @transform_12(%arg0: i32) -> (i32, i32, i32) {
    %c0_i32 = arith.constant 0 : i32
    %c0_i32_0 = arith.constant 0 : i32
    %c0_i32_1 = arith.constant 0 : i32
    return %arg0, %c0_i32, %c0_i32_0 : i32, i32, i32
  }
  func.func @transform_13(%arg0: i32) -> (i32, i32) {
    %c0_i32 = arith.constant 0 : i32
    %c0_i32_0 = arith.constant 0 : i32
    %c0_i32_1 = arith.constant 0 : i32
    return %c0_i32, %c0_i32_0 : i32, i32
  }
  func.func @transform_14(%arg0: i32) -> (i32, i32) {
    %c0_i32 = arith.constant 0 : i32
    %c0_i32_0 = arith.constant 0 : i32
    %c0_i32_1 = arith.constant 0 : i32
    return %c0_i32, %c0_i32_0 : i32, i32
  }
  func.func @transform_15(%arg0: i32) -> (i32, i32) {
    %c0_i32 = arith.constant 0 : i32
    %c0_i32_0 = arith.constant 0 : i32
    %c0_i32_1 = arith.constant 0 : i32
    return %c0_i32, %c0_i32_0 : i32, i32
  }
}

</mosaic_0001>

<llo_original>
// kernel: tpu_custom_call.1
$region0: #{tpu_custom_call.1}
  #allocation0 [shape = 'u32[]', space=smem, size = 0x4, offset = 0x4, fixed_abs, tag = 'smem constant byte address 0x4 - core index']
  #allocation1 [shape = 'u32[144,128]{1,0:T(1,128)}', space=vmem, size = 0x12000, scoped, tag = 'internal scratch']
  #allocation2 [shape = 'f32[8,128]{1,0:T(8,128)}', space=vmem, size = 0x1000, scoped, tag = 'scratch operand']
  %s0 = inlined_call_operand.hbm [shape: f32[8,128], index: 0, kind: input, shape index: {}]
  %s1 = inlined_call_operand.hbm [shape: f32[8,128], index: 1, kind: input, shape index: {}]
  %s2 = inlined_call_operand.hbm [shape: bf16[2,128,128], index: 2, kind: input, shape index: {}]
  %s3 = inlined_call_operand.vmem [shape: f32[1,128], index: 3, kind: input, shape index: {}]
  %s4 = inlined_call_operand.hbm [shape: f32[1,128], index: 4, kind: input, shape index: {}]
  %s5 = inlined_call_operand.hbm [shape: bf16[2,128,128], index: 5, kind: input, shape index: {}]
  %s6 = inlined_call_operand.hbm [shape: bf16[2,128,128], index: 6, kind: input, shape index: {}]
  %s7 = inlined_call_operand.hbm [shape: bf16[2,128,128], index: 7, kind: input, shape index: {}]
  %s8 = inlined_call_operand.hbm [shape: bf16[2,128,128], index: 8, kind: input, shape index: {}]
  %s9 = inlined_call_operand.vmem [shape: f32[2,1,128], index: 9, kind: input, shape index: {}]
  %s10 = inlined_call_operand.vmem [shape: f32[2,1,128], index: 10, kind: input, shape index: {}]
  %s11 = inlined_call_operand.vmem [shape: f32[2,1,128], index: 11, kind: input, shape index: {}]
  %s12 = inlined_call_operand.vmem [shape: f32[2,1,128], index: 12, kind: input, shape index: {}]
  %s13 = inlined_call_operand.vmem [shape: f32[1,128], index: 13, kind: input, shape index: {}]
  %s14 = inlined_call_operand.vmem [shape: f32[1,128], index: 14, kind: input, shape index: {}]
  %s15 = inlined_call_operand.hbm [shape: f32[8,128], index: 15, kind: output, shape index: {}]
  %s16 = sld [smem:[#allocation0]]
  $region133: #{tpu_custom_call.1} parent=0
    _
  %s18 = ssub.s32 1, %s16
  %s19 = scalar_select 0, %s18, %s16
  $region1: #{tpu_custom_call.1} parent=0
    #allocation3 [shape = 'u8[4096]{0}', space=vmem, size = 0x1000, scoped, tag = 'input window, operand 0, single buffered']
    #allocation4 [shape = 's32[2]{0}', space=sflag, size = 0x8, scoped, tag = 'scoped memory for tpu_custom_call.1']
    #allocation5 [shape = 's32[2]{0}', space=sflag, size = 0x8, scoped, tag = 'scoped memory for tpu_custom_call.1']
    #allocation6 [shape = 'u8[4096]{0}', space=vmem, size = 0x1000, scoped, tag = 'input window, operand 1, single buffered']
    #allocation7 [shape = 's32[1]{0}', space=sflag, size = 0x4, scoped, tag = 'scoped memory for tpu_custom_call.1']
    #allocation8 [shape = 'u8[65536]{0}', space=vmem, size = 0x10000, scoped, tag = 'input window, operand 2, single buffered']
    #allocation9 [shape = 'u8[512]{0}', space=vmem, size = 0x400, scoped, tag = 'input window, operand 4, single buffered']
    #allocation10 [shape = 's32[1]{0}', space=sflag, size = 0x4, scoped, tag = 'scoped memory for tpu_custom_call.1']
    #allocation11 [shape = 'u8[65536]{0}', space=vmem, size = 0x10000, scoped, tag = 'input window, operand 5']
    #allocation12 [shape = 'u8[65536]{0}', space=vmem, size = 0x10000, scoped, tag = 'input window, operand 6']
    #allocation13 [shape = 'u8[65536]{0}', space=vmem, size = 0x10000, scoped, tag = 'input window, operand 7']
    #allocation14 [shape = 'u8[65536]{0}', space=vmem, size = 0x10000, scoped, tag = 'input window, operand 8']
    #allocation15 [shape = 'u8[4096]{0}', space=vmem, size = 0x1000, scoped, tag = 'output window, operand 0, single buffered']
    %20 = vsyncpa [#allocation4], 0
    %21 = vsyncpa [#allocation7], 0
    %22 = vsyncpa [#allocation10], 0
    %23 = vsyncpa [#allocation5], 0
    loop: start=0, step=1, limit=4
    $region2: #{tpu_custom_call.1} parent=1 // loop_pre_header
      _
    $region3: #{tpu_custom_call.1} parent=1 // loop_header
      %s25 = sphi 0, %s29
      %p26 = scmp.ge.s32.totalorder %s25, 4
      %s33 = sphi 0, %s33
      %s35 = sphi 0, %s33
      %s36 = sphi 0, %s35
      %s50 = sphi 0, %s36
      %s54 = sphi 0, %s54
      %s56 = sphi 0, %s54
      %s57 = sphi 0, %s56
      %s71 = sphi 0, %s57
      %s75 = sphi 0, %s75
      %s77 = sphi 0, %s75
      %s78 = sphi 0, %s77
      %s92 = sphi 0, %s78
      %s96 = sphi 0, %s96
      %s98 = sphi 0, %s96
      %s99 = sphi 0, %s98
      %s113 = sphi 0, %s99
      %s117 = sphi 0, %s117
      %s119 = sphi 0, %s117
      %s120 = sphi 0, %s119
      %s134 = sphi 0, %s120
      %s140 = sphi 0, %s142
      %s143 = sphi 0, %s140
      %s144 = sphi 0, %s143
      %s160 = sphi 0, %s144
      %s166 = sphi 0, %s168
      %s169 = sphi 0, %s166
      %s170 = sphi 0, %s169
      %s186 = sphi 0, %s170
      %s192 = sphi 0, %s194
      %s195 = sphi 0, %s192
      %s196 = sphi 0, %s195
      %s212 = sphi 0, %s196
      %s218 = sphi 0, %s220
      %s221 = sphi 0, %s218
      %s222 = sphi 0, %s221
      %s238 = sphi 0, %s222
      %s244 = sphi 0, %s246
      %s247 = sphi 0, %s244
      %s248 = sphi 0, %s247
      %s264 = sphi 0, %s248
      %s270 = sphi 0, %s272
      %s273 = sphi 0, %s270
      %s274 = sphi 0, %s273
      %s290 = sphi 0, %s274
      %s296 = sphi 0, %s298
      %s299 = sphi 0, %s296
      %s300 = sphi 0, %s299
      %s316 = sphi 0, %s300
      %s322 = sphi 0, %s324
      %s325 = sphi 0, %s322
      %s326 = sphi 0, %s325
      %s342 = sphi 0, %s326
      %s346 = sphi 0, %s346
      %s348 = sphi 0, %s346
      %s349 = sphi 0, %s348
      %s363 = sphi 0, %s349
      %s367 = sphi 0, %s367
      %s369 = sphi 0, %s367
      %s370 = sphi 0, %s369
      %s384 = sphi 0, %s370
      %s388 = sphi 0, %s388
      %s390 = sphi 0, %s388
      %s391 = sphi 0, %s390
      %s405 = sphi 0, %s391
    $region4: #{tpu_custom_call.1} parent=1 // loop_header_branch
      %28 = sbr.rel (%p26) target = $region8
    $region5: #{tpu_custom_call.1} parent=1 // loop_body
      %s30 = ssub.s32 %s25, 1
      %s31 = ssub.s32 %s25, 2
      %s32 = sadd.s32 %s25, 1
      %s34 = sadd.s32 %s33, 1
      %p37 = scmp.eq.s32.totalorder %s25, 1
      %p38 = scmp.ne.s32.totalorder %s33, %s35
      %p39 = scmp.eq.s32.totalorder %s25, 0
      %p40 = por %p38, %p39
      %p41 = scmp.ne.s32.totalorder %s33, %s35
      %p42 = scmp.eq.s32.totalorder %s30, 1
      %p43 = por %p41, %p42
      %p44 = scmp.ne.s32.totalorder %s35, %s36
      %p45 = scmp.eq.s32.totalorder %s30, 0
      %p46 = por %p44, %p45
      %p47 = scmp.ne.s32.totalorder %s35, %s36
      %p48 = scmp.eq.s32.totalorder %s31, 1
      %p49 = por %p47, %p48
      %p51 = scmp.ne.s32.totalorder %s36, %s50
      %p52 = scmp.eq.s32.totalorder %s31, 0
      %p53 = por %p51, %p52
      %s55 = sadd.s32 %s54, 1
      %p58 = scmp.eq.s32.totalorder %s25, 1
      %p59 = scmp.ne.s32.totalorder %s54, %s56
      %p60 = scmp.eq.s32.totalorder %s25, 0
      %p61 = por %p59, %p60
      %p62 = scmp.ne.s32.totalorder %s54, %s56
      %p63 = scmp.eq.s32.totalorder %s30, 1
      %p64 = por %p62, %p63
      %p65 = scmp.ne.s32.totalorder %s56, %s57
      %p66 = scmp.eq.s32.totalorder %s30, 0
      %p67 = por %p65, %p66
      %p68 = scmp.ne.s32.totalorder %s56, %s57
      %p69 = scmp.eq.s32.totalorder %s31, 1
      %p70 = por %p68, %p69
      %p72 = scmp.ne.s32.totalorder %s57, %s71
      %p73 = scmp.eq.s32.totalorder %s31, 0
      %p74 = por %p72, %p73
      %s76 = sadd.s32 %s75, 1
      %p79 = scmp.eq.s32.totalorder %s25, 1
      %p80 = scmp.ne.s32.totalorder %s75, %s77
      %p81 = scmp.eq.s32.totalorder %s25, 0
      %p82 = por %p80, %p81
      %p83 = scmp.ne.s32.totalorder %s75, %s77
      %p84 = scmp.eq.s32.totalorder %s30, 1
      %p85 = por %p83, %p84
      %p86 = scmp.ne.s32.totalorder %s77, %s78
      %p87 = scmp.eq.s32.totalorder %s30, 0
      %p88 = por %p86, %p87
      %p89 = scmp.ne.s32.totalorder %s77, %s78
      %p90 = scmp.eq.s32.totalorder %s31, 1
      %p91 = por %p89, %p90
      %p93 = scmp.ne.s32.totalorder %s78, %s92
      %p94 = scmp.eq.s32.totalorder %s31, 0
      %p95 = por %p93, %p94
      %s97 = sadd.s32 %s96, 1
      %p100 = scmp.eq.s32.totalorder %s25, 1
      %p101 = scmp.ne.s32.totalorder %s96, %s98
      %p102 = scmp.eq.s32.totalorder %s25, 0
      %p103 = por %p101, %p102
      %p104 = scmp.ne.s32.totalorder %s96, %s98
      %p105 = scmp.eq.s32.totalorder %s30, 1
      %p106 = por %p104, %p105
      %p107 = scmp.ne.s32.totalorder %s98, %s99
      %p108 = scmp.eq.s32.totalorder %s30, 0
      %p109 = por %p107, %p108
      %p110 = scmp.ne.s32.totalorder %s98, %s99
      %p111 = scmp.eq.s32.totalorder %s31, 1
      %p112 = por %p110, %p111
      %p114 = scmp.ne.s32.totalorder %s99, %s113
      %p115 = scmp.eq.s32.totalorder %s31, 0
      %p116 = por %p114, %p115
      %s118 = sadd.s32 %s117, 1
      %p121 = scmp.eq.s32.totalorder %s25, 1
      %p122 = scmp.ne.s32.totalorder %s117, %s119
      %p123 = scmp.eq.s32.totalorder %s25, 0
      %p124 = por %p122, %p123
      %p125 = scmp.ne.s32.totalorder %s117, %s119
      %p126 = scmp.eq.s32.totalorder %s30, 1
      %p127 = por %p125, %p126
      %p128 = scmp.ne.s32.totalorder %s119, %s120
      %p129 = scmp.eq.s32.totalorder %s30, 0
      %p130 = por %p128, %p129
      %p131 = scmp.ne.s32.totalorder %s119, %s120
      %p132 = scmp.eq.s32.totalorder %s31, 1
      %p133 = por %p131, %p132
      %p135 = scmp.ne.s32.totalorder %s120, %s134
      %p136 = scmp.eq.s32.totalorder %s31, 0
      %p137 = por %p135, %p136
      %s138 = ssub.s32 %s25, %s32
      %p139 = scmp.eq.s32.totalorder %s138, 0
      %s141 = sadd.s32 %s140, 1
      %s142 = scalar_select %p139, %s140, %s141
      %p145 = pneg %p139
      %p146 = scmp.eq.s32.totalorder %s25, 1
      %p147 = por %p145, %p146
      %p148 = scmp.ne.s32.totalorder %s140, %s143
      %p149 = scmp.eq.s32.totalorder %s25, 0
      %p150 = por %p148, %p149
      %p151 = scmp.ne.s32.totalorder %s140, %s143
      %p152 = scmp.eq.s32.totalorder %s30, 1
      %p153 = por %p151, %p152
      %p154 = scmp.ne.s32.totalorder %s143, %s144
      %p155 = scmp.eq.s32.totalorder %s30, 0
      %p156 = por %p154, %p155
      %p157 = scmp.ne.s32.totalorder %s143, %s144
      %p158 = scmp.eq.s32.totalorder %s31, 1
      %p159 = por %p157, %p158
      %p161 = scmp.ne.s32.totalorder %s144, %s160
      %p162 = scmp.eq.s32.totalorder %s31, 0
      %p163 = por %p161, %p162
      %s164 = ssub.s32 %s25, %s32
      %p165 = scmp.eq.s32.totalorder %s164, 0
      %s167 = sadd.s32 %s166, 1
      %s168 = scalar_select %p165, %s166, %s167
      %p171 = pneg %p165
      %p172 = scmp.eq.s32.totalorder %s25, 1
      %p173 = por %p171, %p172
      %p174 = scmp.ne.s32.totalorder %s166, %s169
      %p175 = scmp.eq.s32.totalorder %s25, 0
      %p176 = por %p174, %p175
      %p177 = scmp.ne.s32.totalorder %s166, %s169
      %p178 = scmp.eq.s32.totalorder %s30, 1
      %p179 = por %p177, %p178
      %p180 = scmp.ne.s32.totalorder %s169, %s170
      %p181 = scmp.eq.s32.totalorder %s30, 0
      %p182 = por %p180, %p181
      %p183 = scmp.ne.s32.totalorder %s169, %s170
      %p184 = scmp.eq.s32.totalorder %s31, 1
      %p185 = por %p183, %p184
      %p187 = scmp.ne.s32.totalorder %s170, %s186
      %p188 = scmp.eq.s32.totalorder %s31, 0
      %p189 = por %p187, %p188
      %s190 = ssub.s32 %s25, %s32
      %p191 = scmp.eq.s32.totalorder %s190, 0
      %s193 = sadd.s32 %s192, 1
      %s194 = scalar_select %p191, %s192, %s193
      %p197 = pneg %p191
      %p198 = scmp.eq.s32.totalorder %s25, 1
      %p199 = por %p197, %p198
      %p200 = scmp.ne.s32.totalorder %s192, %s195
      %p201 = scmp.eq.s32.totalorder %s25, 0
      %p202 = por %p200, %p201
      %p203 = scmp.ne.s32.totalorder %s192, %s195
      %p204 = scmp.eq.s32.totalorder %s30, 1
      %p205 = por %p203, %p204
      %p206 = scmp.ne.s32.totalorder %s195, %s196
      %p207 = scmp.eq.s32.totalorder %s30, 0
      %p208 = por %p206, %p207
      %p209 = scmp.ne.s32.totalorder %s195, %s196
      %p210 = scmp.eq.s32.totalorder %s31, 1
      %p211 = por %p209, %p210
      %p213 = scmp.ne.s32.totalorder %s196, %s212
      %p214 = scmp.eq.s32.totalorder %s31, 0
      %p215 = por %p213, %p214
      %s216 = ssub.s32 %s25, %s32
      %p217 = scmp.eq.s32.totalorder %s216, 0
      %s219 = sadd.s32 %s218, 1
      %s220 = scalar_select %p217, %s218, %s219
      %p223 = pneg %p217
      %p224 = scmp.eq.s32.totalorder %s25, 1
      %p225 = por %p223, %p224
      %p226 = scmp.ne.s32.totalorder %s218, %s221
      %p227 = scmp.eq.s32.totalorder %s25, 0
      %p228 = por %p226, %p227
      %p229 = scmp.ne.s32.totalorder %s218, %s221
      %p230 = scmp.eq.s32.totalorder %s30, 1
      %p231 = por %p229, %p230
      %p232 = scmp.ne.s32.totalorder %s221, %s222
      %p233 = scmp.eq.s32.totalorder %s30, 0
      %p234 = por %p232, %p233
      %p235 = scmp.ne.s32.totalorder %s221, %s222
      %p236 = scmp.eq.s32.totalorder %s31, 1
      %p237 = por %p235, %p236
      %p239 = scmp.ne.s32.totalorder %s222, %s238
      %p240 = scmp.eq.s32.totalorder %s31, 0
      %p241 = por %p239, %p240
      %s242 = ssub.s32 %s25, %s32
      %p243 = scmp.eq.s32.totalorder %s242, 0
      %s245 = sadd.s32 %s244, 1
      %s246 = scalar_select %p243, %s244, %s245
      %p249 = pneg %p243
      %p250 = scmp.eq.s32.totalorder %s25, 1
      %p251 = por %p249, %p250
      %p252 = scmp.ne.s32.totalorder %s244, %s247
      %p253 = scmp.eq.s32.totalorder %s25, 0
      %p254 = por %p252, %p253
      %p255 = scmp.ne.s32.totalorder %s244, %s247
      %p256 = scmp.eq.s32.totalorder %s30, 1
      %p257 = por %p255, %p256
      %p258 = scmp.ne.s32.totalorder %s247, %s248
      %p259 = scmp.eq.s32.totalorder %s30, 0
      %p260 = por %p258, %p259
      %p261 = scmp.ne.s32.totalorder %s247, %s248
      %p262 = scmp.eq.s32.totalorder %s31, 1
      %p263 = por %p261, %p262
      %p265 = scmp.ne.s32.totalorder %s248, %s264
      %p266 = scmp.eq.s32.totalorder %s31, 0
      %p267 = por %p265, %p266
      %s268 = ssub.s32 %s25, %s32
      %p269 = scmp.eq.s32.totalorder %s268, 0
      %s271 = sadd.s32 %s270, 1
      %s272 = scalar_select %p269, %s270, %s271
      %p275 = pneg %p269
      %p276 = scmp.eq.s32.totalorder %s25, 1
      %p277 = por %p275, %p276
      %p278 = scmp.ne.s32.totalorder %s270, %s273
      %p279 = scmp.eq.s32.totalorder %s25, 0
      %p280 = por %p278, %p279
      %p281 = scmp.ne.s32.totalorder %s270, %s273
      %p282 = scmp.eq.s32.totalorder %s30, 1
      %p283 = por %p281, %p282
      %p284 = scmp.ne.s32.totalorder %s273, %s274
      %p285 = scmp.eq.s32.totalorder %s30, 0
      %p286 = por %p284, %p285
      %p287 = scmp.ne.s32.totalorder %s273, %s274
      %p288 = scmp.eq.s32.totalorder %s31, 1
      %p289 = por %p287, %p288
      %p291 = scmp.ne.s32.totalorder %s274, %s290
      %p292 = scmp.eq.s32.totalorder %s31, 0
      %p293 = por %p291, %p292
      %s294 = ssub.s32 %s25, %s32
      %p295 = scmp.eq.s32.totalorder %s294, 0
      %s297 = sadd.s32 %s296, 1
      %s298 = scalar_select %p295, %s296, %s297
      %p301 = pneg %p295
      %p302 = scmp.eq.s32.totalorder %s25, 1
      %p303 = por %p301, %p302
      %p304 = scmp.ne.s32.totalorder %s296, %s299
      %p305 = scmp.eq.s32.totalorder %s25, 0
      %p306 = por %p304, %p305
      %p307 = scmp.ne.s32.totalorder %s296, %s299
      %p308 = scmp.eq.s32.totalorder %s30, 1
      %p309 = por %p307, %p308
      %p310 = scmp.ne.s32.totalorder %s299, %s300
      %p311 = scmp.eq.s32.totalorder %s30, 0
      %p312 = por %p310, %p311
      %p313 = scmp.ne.s32.totalorder %s299, %s300
      %p314 = scmp.eq.s32.totalorder %s31, 1
      %p315 = por %p313, %p314
      %p317 = scmp.ne.s32.totalorder %s300, %s316
      %p318 = scmp.eq.s32.totalorder %s31, 0
      %p319 = por %p317, %p318
      %s320 = ssub.s32 %s25, %s32
      %p321 = scmp.eq.s32.totalorder %s320, 0
      %s323 = sadd.s32 %s322, 1
      %s324 = scalar_select %p321, %s322, %s323
      %p327 = pneg %p321
      %p328 = scmp.eq.s32.totalorder %s25, 1
      %p329 = por %p327, %p328
      %p330 = scmp.ne.s32.totalorder %s322, %s325
      %p331 = scmp.eq.s32.totalorder %s25, 0
      %p332 = por %p330, %p331
      %p333 = scmp.ne.s32.totalorder %s322, %s325
      %p334 = scmp.eq.s32.totalorder %s30, 1
      %p335 = por %p333, %p334
      %p336 = scmp.ne.s32.totalorder %s325, %s326
      %p337 = scmp.eq.s32.totalorder %s30, 0
      %p338 = por %p336, %p337
      %p339 = scmp.ne.s32.totalorder %s325, %s326
      %p340 = scmp.eq.s32.totalorder %s31, 1
      %p341 = por %p339, %p340
      %p343 = scmp.ne.s32.totalorder %s326, %s342
      %p344 = scmp.eq.s32.totalorder %s31, 0
      %p345 = por %p343, %p344
      %s347 = sadd.s32 %s346, 1
      %p350 = scmp.eq.s32.totalorder %s25, 1
      %p351 = scmp.ne.s32.totalorder %s346, %s348
      %p352 = scmp.eq.s32.totalorder %s25, 0
      %p353 = por %p351, %p352
      %p354 = scmp.ne.s32.totalorder %s346, %s348
      %p355 = scmp.eq.s32.totalorder %s30, 1
      %p356 = por %p354, %p355
      %p357 = scmp.ne.s32.totalorder %s348, %s349
      %p358 = scmp.eq.s32.totalorder %s30, 0
      %p359 = por %p357, %p358
      %p360 = scmp.ne.s32.totalorder %s348, %s349
      %p361 = scmp.eq.s32.totalorder %s31, 1
      %p362 = por %p360, %p361
      %p364 = scmp.ne.s32.totalorder %s349, %s363
      %p365 = scmp.eq.s32.totalorder %s31, 0
      %p366 = por %p364, %p365
      %s368 = sadd.s32 %s367, 1
      %p371 = scmp.eq.s32.totalorder %s25, 1
      %p372 = scmp.ne.s32.totalorder %s367, %s369
      %p373 = scmp.eq.s32.totalorder %s25, 0
      %p374 = por %p372, %p373
      %p375 = scmp.ne.s32.totalorder %s367, %s369
      %p376 = scmp.eq.s32.totalorder %s30, 1
      %p377 = por %p375, %p376
      %p378 = scmp.ne.s32.totalorder %s369, %s370
      %p379 = scmp.eq.s32.totalorder %s30, 0
      %p380 = por %p378, %p379
      %p381 = scmp.ne.s32.totalorder %s369, %s370
      %p382 = scmp.eq.s32.totalorder %s31, 1
      %p383 = por %p381, %p382
      %p385 = scmp.ne.s32.totalorder %s370, %s384
      %p386 = scmp.eq.s32.totalorder %s31, 0
      %p387 = por %p385, %p386
      %s389 = sadd.s32 %s388, 1
      %p392 = scmp.eq.s32.totalorder %s25, 1
      %p393 = scmp.ne.s32.totalorder %s388, %s390
      %p394 = scmp.eq.s32.totalorder %s25, 0
      %p395 = por %p393, %p394
      %p396 = scmp.ne.s32.totalorder %s388, %s390
      %p397 = scmp.eq.s32.totalorder %s30, 1
      %p398 = por %p396, %p397
      %p399 = scmp.ne.s32.totalorder %s390, %s391
      %p400 = scmp.eq.s32.totalorder %s30, 0
      %p401 = por %p399, %p400
      %p402 = scmp.ne.s32.totalorder %s390, %s391
      %p403 = scmp.eq.s32.totalorder %s31, 1
      %p404 = por %p402, %p403
      %p406 = scmp.ne.s32.totalorder %s391, %s405
      %p407 = scmp.eq.s32.totalorder %s31, 0
      %p408 = por %p406, %p407
      %p409 = scmp.le.s32.totalorder 1, %s25
      %p410 = scmp.lt.s32.totalorder %s25, 3
      %p411 = pnand %p409, %p410
      %p412 = pneg %p411
      // Predicated region
      $region9: #{tpu_custom_call.1} parent=5 // pred_check
        _
      $region10: #{tpu_custom_call.1} parent=5 // pred_check_branch
        %414 = sbr.rel (%p411) target = $region12
      $region11: #{tpu_custom_call.1} parent=5 // pred_region
        %s415 = ssub.s32 %s25, 1
        // Predicated region
        $region13: #{tpu_custom_call.1} parent=11 // pred_check
          %p416 = pneg %p46
        $region14: #{tpu_custom_call.1} parent=11 // pred_check_branch
          %418 = sbr.rel (%p416) target = $region16
        $region15: #{tpu_custom_call.1} parent=11 // pred_region
          %s420 = ssub.s32 128, 128
          %421 = vsyncadd [#allocation4], %s420
          %s423 = sshll.u32 [#allocation3], 4
          %s424 = int_to_ptr.vmem [resolvable:$true] %s423
          %426 = dma.hbm_to_vmem [thread:$0]  %s0, 128, %s424, [#allocation4]
        $region16: #{tpu_custom_call.1} parent=11 // pred_fallthru
          _
        // Predicated region
        $region17: #{tpu_custom_call.1} parent=11 // pred_check
          %p427 = pneg %p67
        $region18: #{tpu_custom_call.1} parent=11 // pred_check_branch
          %429 = sbr.rel (%p427) target = $region20
        $region19: #{tpu_custom_call.1} parent=11 // pred_region
          %s431 = ssub.s32 128, 128
          %432 = vsyncadd [#allocation7], %s431
          %s434 = sshll.u32 [#allocation6], 4
          %s435 = int_to_ptr.vmem [resolvable:$true] %s434
          %437 = dma.hbm_to_vmem [thread:$0]  %s1, 128, %s435, [#allocation7]
        $region20: #{tpu_custom_call.1} parent=11 // pred_fallthru
          _
        // Predicated region
        $region21: #{tpu_custom_call.1} parent=11 // pred_check
          %p438 = pneg %p88
        $region22: #{tpu_custom_call.1} parent=11 // pred_check_branch
          %440 = sbr.rel (%p438) target = $region24
        $region23: #{tpu_custom_call.1} parent=11 // pred_region
          %s442 = ssub.s32 2048, 2048
          %443 = vsyncadd [#allocation7], %s442
          %s444 = sshll.u32 [#allocation8], 4
          %s445 = int_to_ptr.vmem [resolvable:$true] %s444
          %450 = dma.hbm_to_vmem [thread:$0]  %s2, 2048, %s445, [#allocation7], 64, 64, 4
        $region24: #{tpu_custom_call.1} parent=11 // pred_fallthru
          _
        // Predicated region
        $region25: #{tpu_custom_call.1} parent=11 // pred_check
          %p451 = pneg %p109
        $region26: #{tpu_custom_call.1} parent=11 // pred_check_branch
          %453 = sbr.rel (%p451) target = $region28
        $region27: #{tpu_custom_call.1} parent=11 // pred_region
          _
        $region28: #{tpu_custom_call.1} parent=11 // pred_fallthru
          _
        // Predicated region
        $region29: #{tpu_custom_call.1} parent=11 // pred_check
          %p454 = pneg %p130
        $region30: #{tpu_custom_call.1} parent=11 // pred_check_branch
          %456 = sbr.rel (%p454) target = $region32
        $region31: #{tpu_custom_call.1} parent=11 // pred_region
          %s458 = ssub.s32 16, 16
          %459 = vsyncadd [#allocation10], %s458
          %s461 = sshll.u32 [#allocation9], 4
          %s462 = int_to_ptr.vmem [resolvable:$true] %s461
          %464 = dma.hbm_to_vmem [thread:$0]  %s4, 16, %s462, [#allocation10]
        $region32: #{tpu_custom_call.1} parent=11 // pred_fallthru
          _
        // Predicated region
        $region33: #{tpu_custom_call.1} parent=11 // pred_check
          %p465 = pneg %p359
        $region34: #{tpu_custom_call.1} parent=11 // pred_check_branch
          %467 = sbr.rel (%p465) target = $region36
        $region35: #{tpu_custom_call.1} parent=11 // pred_region
          _
        $region36: #{tpu_custom_call.1} parent=11 // pred_fallthru
          _
        // Predicated region
        $region37: #{tpu_custom_call.1} parent=11 // pred_check
          %p468 = pneg %p380
        $region38: #{tpu_custom_call.1} parent=11 // pred_check_branch
          %470 = sbr.rel (%p468) target = $region40
        $region39: #{tpu_custom_call.1} parent=11 // pred_region
          _
        $region40: #{tpu_custom_call.1} parent=11 // pred_fallthru
          _
      $region12: #{tpu_custom_call.1} parent=5 // pred_fallthru
        _
      %p471 = scmp.lt.s32.totalorder %s25, 2
      // Predicated region
      $region41: #{tpu_custom_call.1} parent=5 // pred_check
        %p472 = pneg %p471
      $region42: #{tpu_custom_call.1} parent=5 // pred_check_branch
        %474 = sbr.rel (%p472) target = $region44
      $region43: #{tpu_custom_call.1} parent=5 // pred_region
        // Predicated region
        $region45: #{tpu_custom_call.1} parent=43 // pred_check
          %p475 = pneg %p150
        $region46: #{tpu_custom_call.1} parent=43 // pred_check_branch
          %477 = sbr.rel (%p475) target = $region48
        $region47: #{tpu_custom_call.1} parent=43 // pred_region
          %s478 = sand.u32 %s25, 1
          %s479 = scalar_lea.sflag [#allocation4], %s478
          %s480 = sand.u32 %s140, 1
          %s481 = smul.addr %s480, 64
          %s482 = scalar_lea.vmem [#allocation11], %s481
          %s484 = ssub.s32 1024, 1024
          %485 = vsyncadd %s479, %s484
          %s486 = smul.addr %s25, 16
          %s487 = smul.addr %s486, 64
          %s488 = scalar_lea.hbm %s5, %s487
          %s489 = sshll.u32 %s482, 4
          %s490 = int_to_ptr.vmem [resolvable:$true] %s489
          %495 = dma.hbm_to_vmem [thread:$0]  %s488, 1024, %s490, %s479, 64, 64, 4
        $region48: #{tpu_custom_call.1} parent=43 // pred_fallthru
          _
        // Predicated region
        $region49: #{tpu_custom_call.1} parent=43 // pred_check
          %p496 = pneg %p176
        $region50: #{tpu_custom_call.1} parent=43 // pred_check_branch
          %498 = sbr.rel (%p496) target = $region52
        $region51: #{tpu_custom_call.1} parent=43 // pred_region
          %s499 = sand.u32 %s25, 1
          %s500 = scalar_lea.sflag [#allocation4], %s499
          %s501 = sand.u32 %s166, 1
          %s502 = smul.addr %s501, 64
          %s503 = scalar_lea.vmem [#allocation12], %s502
          %s505 = ssub.s32 1024, 1024
          %506 = vsyncadd %s500, %s505
          %s507 = smul.addr %s25, 16
          %s508 = smul.addr %s507, 64
          %s509 = scalar_lea.hbm %s6, %s508
          %s510 = sshll.u32 %s503, 4
          %s511 = int_to_ptr.vmem [resolvable:$true] %s510
          %516 = dma.hbm_to_vmem [thread:$0]  %s509, 1024, %s511, %s500, 64, 64, 4
        $region52: #{tpu_custom_call.1} parent=43 // pred_fallthru
          _
        // Predicated region
        $region53: #{tpu_custom_call.1} parent=43 // pred_check
          %p517 = pneg %p202
        $region54: #{tpu_custom_call.1} parent=43 // pred_check_branch
          %519 = sbr.rel (%p517) target = $region56
        $region55: #{tpu_custom_call.1} parent=43 // pred_region
          %s520 = sand.u32 %s25, 1
          %s521 = scalar_lea.sflag [#allocation4], %s520
          %s522 = sand.u32 %s192, 1
          %s523 = smul.addr %s522, 64
          %s524 = scalar_lea.vmem [#allocation13], %s523
          %s526 = ssub.s32 1024, 1024
          %527 = vsyncadd %s521, %s526
          %s528 = smul.addr %s25, 16
          %s529 = smul.addr %s528, 64
          %s530 = scalar_lea.hbm %s7, %s529
          %s531 = sshll.u32 %s524, 4
          %s532 = int_to_ptr.vmem [resolvable:$true] %s531
          %537 = dma.hbm_to_vmem [thread:$0]  %s530, 1024, %s532, %s521, 64, 64, 4
        $region56: #{tpu_custom_call.1} parent=43 // pred_fallthru
          _
        // Predicated region
        $region57: #{tpu_custom_call.1} parent=43 // pred_check
          %p538 = pneg %p228
        $region58: #{tpu_custom_call.1} parent=43 // pred_check_branch
          %540 = sbr.rel (%p538) target = $region60
        $region59: #{tpu_custom_call.1} parent=43 // pred_region
          %s541 = sand.u32 %s25, 1
          %s542 = scalar_lea.sflag [#allocation4], %s541
          %s543 = sand.u32 %s218, 1
          %s544 = smul.addr %s543, 64
          %s545 = scalar_lea.vmem [#allocation14], %s544
          %s547 = ssub.s32 1024, 1024
          %548 = vsyncadd %s542, %s547
          %s549 = smul.addr %s25, 16
          %s550 = smul.addr %s549, 64
          %s551 = scalar_lea.hbm %s8, %s550
          %s552 = sshll.u32 %s545, 4
          %s553 = int_to_ptr.vmem [resolvable:$true] %s552
          %558 = dma.hbm_to_vmem [thread:$0]  %s551, 1024, %s553, %s542, 64, 64, 4
        $region60: #{tpu_custom_call.1} parent=43 // pred_fallthru
          _
        // Predicated region
        $region61: #{tpu_custom_call.1} parent=43 // pred_check
          %p559 = pneg %p254
        $region62: #{tpu_custom_call.1} parent=43 // pred_check_branch
          %561 = sbr.rel (%p559) target = $region64
        $region63: #{tpu_custom_call.1} parent=43 // pred_region
          %p562 = scmp.lt.s32.totalorder %s25, 1
          %s563 = scalar_select %p562, %s25, 1
          %s564 = scalar_lea.vmem %s9, %s563
        $region64: #{tpu_custom_call.1} parent=43 // pred_fallthru
          _
        // Predicated region
        $region65: #{tpu_custom_call.1} parent=43 // pred_check
          %p565 = pneg %p280
        $region66: #{tpu_custom_call.1} parent=43 // pred_check_branch
          %567 = sbr.rel (%p565) target = $region68
        $region67: #{tpu_custom_call.1} parent=43 // pred_region
          %p568 = scmp.lt.s32.totalorder %s25, 1
          %s569 = scalar_select %p568, %s25, 1
          %s570 = scalar_lea.vmem %s10, %s569
        $region68: #{tpu_custom_call.1} parent=43 // pred_fallthru
          _
        // Predicated region
        $region69: #{tpu_custom_call.1} parent=43 // pred_check
          %p571 = pneg %p306
        $region70: #{tpu_custom_call.1} parent=43 // pred_check_branch
          %573 = sbr.rel (%p571) target = $region72
        $region71: #{tpu_custom_call.1} parent=43 // pred_region
          %p574 = scmp.lt.s32.totalorder %s25, 1
          %s575 = scalar_select %p574, %s25, 1
          %s576 = scalar_lea.vmem %s11, %s575
        $region72: #{tpu_custom_call.1} parent=43 // pred_fallthru
          _
        // Predicated region
        $region73: #{tpu_custom_call.1} parent=43 // pred_check
          %p577 = pneg %p332
        $region74: #{tpu_custom_call.1} parent=43 // pred_check_branch
          %579 = sbr.rel (%p577) target = $region76
        $region75: #{tpu_custom_call.1} parent=43 // pred_region
          %p580 = scmp.lt.s32.totalorder %s25, 1
          %s581 = scalar_select %p580, %s25, 1
          %s582 = scalar_lea.vmem %s12, %s581
        $region76: #{tpu_custom_call.1} parent=43 // pred_fallthru
          _
      $region44: #{tpu_custom_call.1} parent=5 // pred_fallthru
        _
      %p583 = scmp.le.s32.totalorder 1, %s25
      %p584 = scmp.lt.s32.totalorder %s25, 3
      %p585 = pnand %p583, %p584
      %p586 = pneg %p585
      // Predicated region
      $region77: #{tpu_custom_call.1} parent=5 // pred_check
        _
      $region78: #{tpu_custom_call.1} parent=5 // pred_check_branch
        %588 = sbr.rel (%p585) target = $region80
      $region79: #{tpu_custom_call.1} parent=5 // pred_region
        %s589 = ssub.s32 %s25, 1
        // Predicated region
        $region81: #{tpu_custom_call.1} parent=79 // pred_check
          %p590 = pneg %p46
        $region82: #{tpu_custom_call.1} parent=79 // pred_check_branch
          %592 = sbr.rel (%p590) target = $region84
        $region83: #{tpu_custom_call.1} parent=79 // pred_region
          %593 = dma.done [#allocation4], 128
        $region84: #{tpu_custom_call.1} parent=79 // pred_fallthru
          _
        // Predicated region
        $region85: #{tpu_custom_call.1} parent=79 // pred_check
          %p594 = pneg %p67
        $region86: #{tpu_custom_call.1} parent=79 // pred_check_branch
          %596 = sbr.rel (%p594) target = $region88
        $region87: #{tpu_custom_call.1} parent=79 // pred_region
          %597 = dma.done [#allocation7], 128
        $region88: #{tpu_custom_call.1} parent=79 // pred_fallthru
          _
        // Predicated region
        $region89: #{tpu_custom_call.1} parent=79 // pred_check
          %p598 = pneg %p88
        $region90: #{tpu_custom_call.1} parent=79 // pred_check_branch
          %600 = sbr.rel (%p598) target = $region92
        $region91: #{tpu_custom_call.1} parent=79 // pred_region
          %601 = dma.done [#allocation7], 2048
        $region92: #{tpu_custom_call.1} parent=79 // pred_fallthru
          _
        // Predicated region
        $region93: #{tpu_custom_call.1} parent=79 // pred_check
          %p602 = pneg %p130
        $region94: #{tpu_custom_call.1} parent=79 // pred_check_branch
          %604 = sbr.rel (%p602) target = $region96
        $region95: #{tpu_custom_call.1} parent=79 // pred_region
          %605 = dma.done [#allocation10], 16
        $region96: #{tpu_custom_call.1} parent=79 // pred_fallthru
          _
        %s606 = sand.u32 %s30, 1
        %s607 = scalar_lea.sflag [#allocation4], %s606
        %s608 = sand.u32 %s143, 1
        %s609 = smul.addr %s608, 64
        %s610 = scalar_lea.vmem [#allocation11], %s609
        // Predicated region
        $region97: #{tpu_custom_call.1} parent=79 // pred_check
          %p611 = pneg %p156
        $region98: #{tpu_custom_call.1} parent=79 // pred_check_branch
          %613 = sbr.rel (%p611) target = $region100
        $region99: #{tpu_custom_call.1} parent=79 // pred_region
          %614 = dma.done %s607, 1024
        $region100: #{tpu_custom_call.1} parent=79 // pred_fallthru
          _
        %s615 = sand.u32 %s30, 1
        %s616 = scalar_lea.sflag [#allocation4], %s615
        %s617 = sand.u32 %s169, 1
        %s618 = smul.addr %s617, 64
        %s619 = scalar_lea.vmem [#allocation12], %s618
        // Predicated region
        $region101: #{tpu_custom_call.1} parent=79 // pred_check
          %p620 = pneg %p182
        $region102: #{tpu_custom_call.1} parent=79 // pred_check_branch
          %622 = sbr.rel (%p620) target = $region104
        $region103: #{tpu_custom_call.1} parent=79 // pred_region
          %623 = dma.done %s616, 1024
        $region104: #{tpu_custom_call.1} parent=79 // pred_fallthru
          _
        %s624 = sand.u32 %s30, 1
        %s625 = scalar_lea.sflag [#allocation4], %s624
        %s626 = sand.u32 %s195, 1
        %s627 = smul.addr %s626, 64
        %s628 = scalar_lea.vmem [#allocation13], %s627
        // Predicated region
        $region105: #{tpu_custom_call.1} parent=79 // pred_check
          %p629 = pneg %p208
        $region106: #{tpu_custom_call.1} parent=79 // pred_check_branch
          %631 = sbr.rel (%p629) target = $region108
        $region107: #{tpu_custom_call.1} parent=79 // pred_region
          %632 = dma.done %s625, 1024
        $region108: #{tpu_custom_call.1} parent=79 // pred_fallthru
          _
        %s633 = sand.u32 %s30, 1
        %s634 = scalar_lea.sflag [#allocation4], %s633
        %s635 = sand.u32 %s221, 1
        %s636 = smul.addr %s635, 64
        %s637 = scalar_lea.vmem [#allocation14], %s636
        // Predicated region
        $region109: #{tpu_custom_call.1} parent=79 // pred_check
          %p638 = pneg %p234
        $region110: #{tpu_custom_call.1} parent=79 // pred_check_branch
          %640 = sbr.rel (%p638) target = $region112
        $region111: #{tpu_custom_call.1} parent=79 // pred_region
          %641 = dma.done %s634, 1024
        $region112: #{tpu_custom_call.1} parent=79 // pred_fallthru
          _
        %p642 = pneg %p46
        %p643 = pneg %p43
        %p644 = pneg %p67
        %p645 = pneg %p64
        %p646 = pneg %p88
        %p647 = pneg %p85
        %p648 = pneg %p109
        %p649 = pneg %p106
        %p650 = pneg %p130
        %p651 = pneg %p127
        %s652 = sand.u32 %s30, 1
        %s653 = scalar_lea.sflag [#allocation4], %s652
        %s654 = sand.u32 %s143, 1
        %s655 = smul.addr %s654, 64
        %s656 = scalar_lea.vmem [#allocation11], %s655
        %p657 = pneg %p156
        %p658 = pneg %p153
        %s659 = sand.u32 %s30, 1
        %s660 = scalar_lea.sflag [#allocation4], %s659
        %s661 = sand.u32 %s169, 1
        %s662 = smul.addr %s661, 64
        %s663 = scalar_lea.vmem [#allocation12], %s662
        %p664 = pneg %p182
        %p665 = pneg %p179
        %s666 = sand.u32 %s30, 1
        %s667 = scalar_lea.sflag [#allocation4], %s666
        %s668 = sand.u32 %s195, 1
        %s669 = smul.addr %s668, 64
        %s670 = scalar_lea.vmem [#allocation13], %s669
        %p671 = pneg %p208
        %p672 = pneg %p205
        %s673 = sand.u32 %s30, 1
        %s674 = scalar_lea.sflag [#allocation4], %s673
        %s675 = sand.u32 %s221, 1
        %s676 = smul.addr %s675, 64
        %s677 = scalar_lea.vmem [#allocation14], %s676
        %p678 = pneg %p234
        %p679 = pneg %p231
        %p680 = scmp.lt.s32.totalorder %s30, 1
        %s681 = scalar_select %p680, %s30, 1
        %s682 = scalar_lea.vmem %s9, %s681
        %p683 = pneg %p260
        %p684 = pneg %p257
        %p685 = scmp.lt.s32.totalorder %s30, 1
        %s686 = scalar_select %p685, %s30, 1
        %s687 = scalar_lea.vmem %s10, %s686
        %p688 = pneg %p286
        %p689 = pneg %p283
        %p690 = scmp.lt.s32.totalorder %s30, 1
        %s691 = scalar_select %p690, %s30, 1
        %s692 = scalar_lea.vmem %s11, %s691
        %p693 = pneg %p312
        %p694 = pneg %p309
        %p695 = scmp.lt.s32.totalorder %s30, 1
        %s696 = scalar_select %p695, %s30, 1
        %s697 = scalar_lea.vmem %s12, %s696
        %p698 = pneg %p338
        %p699 = pneg %p335
        %p700 = pneg %p359
        %p701 = pneg %p356
        %p702 = pneg %p380
        %p703 = pneg %p377
        %p704 = pneg %p401
        %p705 = pneg %p398
        %p706 = scmp.lt.s32.totalorder %s30, 1
        %s707 = scalar_select %p706, %s30, 1
        %s708 = scalar_lea.vmem %s9, %s707
        %p709 = scmp.lt.s32.totalorder %s30, 1
        %s710 = scalar_select %p709, %s30, 1
        %s711 = scalar_lea.vmem %s10, %s710
        %p712 = scmp.lt.s32.totalorder %s30, 1
        %s713 = scalar_select %p712, %s30, 1
        %s714 = scalar_lea.vmem %s11, %s713
        %p715 = scmp.lt.s32.totalorder %s30, 1
        %s716 = scalar_select %p715, %s30, 1
        %s717 = scalar_lea.vmem %s12, %s716
        %p719 = scmp.eq.s32.totalorder %s30, 0
        // Predicated region
        $region113: #{tpu_custom_call.1} parent=79 // pred_check
          %p720 = pneg %p719
        $region114: #{tpu_custom_call.1} parent=79 // pred_check_branch
          %722 = sbr.rel (%p720) target = $region116
        $region115: #{tpu_custom_call.1} parent=79 // pred_region
          %v723 = vld [vmem:[#allocation3] sm:$0xff]
          %v724 = vpack.c.bf16 %v723, %v723
          %v725 = vld [vmem:[#allocation8] sm:$0xf]
          %v726 = vld [vmem:[#allocation8 + $0x4] sm:$0xf]
          %v727 = vld [vmem:[#allocation8 + $0x8] sm:$0xf]
          %v728 = vld [vmem:[#allocation8 + $0xc] sm:$0xf]
          %v729 = vld [vmem:[#allocation8 + $0x10] sm:$0xf]
          %v730 = vld [vmem:[#allocation8 + $0x14] sm:$0xf]
          %v731 = vld [vmem:[#allocation8 + $0x18] sm:$0xf]
          %v732 = vld [vmem:[#allocation8 + $0x1c] sm:$0xf]
          %v733 = vld [vmem:[#allocation8 + $0x20] sm:$0xf]
          %v734 = vld [vmem:[#allocation8 + $0x24] sm:$0xf]
          %v735 = vld [vmem:[#allocation8 + $0x28] sm:$0xf]
          %v736 = vld [vmem:[#allocation8 + $0x2c] sm:$0xf]
          %v737 = vld [vmem:[#allocation8 + $0x30] sm:$0xf]
          %v738 = vld [vmem:[#allocation8 + $0x34] sm:$0xf]
          %v739 = vld [vmem:[#allocation8 + $0x38] sm:$0xf]
          %v740 = vld [vmem:[#allocation8 + $0x3c] sm:$0xf]
          %v741 = vld [vmem:[#allocation6] sm:$0xff]
          %v742 = vpack.c.bf16 %v741, %v741
          %s743 = scalar_lea.vmem [#allocation8], 64
          %v744 = vld [vmem:[%s743] sm:$0xf]
          %v745 = vld [vmem:[%s743 + $0x4] sm:$0xf]
          %v746 = vld [vmem:[%s743 + $0x8] sm:$0xf]
          %v747 = vld [vmem:[%s743 + $0xc] sm:$0xf]
          %v748 = vld [vmem:[%s743 + $0x10] sm:$0xf]
          %v749 = vld [vmem:[%s743 + $0x14] sm:$0xf]
          %v750 = vld [vmem:[%s743 + $0x18] sm:$0xf]
          %v751 = vld [vmem:[%s743 + $0x1c] sm:$0xf]
          %v752 = vld [vmem:[%s743 + $0x20] sm:$0xf]
          %v753 = vld [vmem:[%s743 + $0x24] sm:$0xf]
          %v754 = vld [vmem:[%s743 + $0x28] sm:$0xf]
          %v755 = vld [vmem:[%s743 + $0x2c] sm:$0xf]
          %v756 = vld [vmem:[%s743 + $0x30] sm:$0xf]
          %v757 = vld [vmem:[%s743 + $0x34] sm:$0xf]
          %v758 = vld [vmem:[%s743 + $0x38] sm:$0xf]
          %v759 = vld [vmem:[%s743 + $0x3c] sm:$0xf]
          %v776 = vunpack.c.l.b16 %v744
          %v777 = vunpack.c.l.b16 %v745
          %v778 = vunpack.c.l.b16 %v746
          %v779 = vunpack.c.l.b16 %v747
          %v780 = vunpack.c.l.b16 %v748
          %v781 = vunpack.c.l.b16 %v749
          %v782 = vunpack.c.l.b16 %v750
          %v783 = vunpack.c.l.b16 %v751
          %v784 = vunpack.c.l.b16 %v752
          %v785 = vunpack.c.l.b16 %v753
          %v786 = vunpack.c.l.b16 %v754
          %v787 = vunpack.c.l.b16 %v755
          %v788 = vunpack.c.l.b16 %v756
          %v789 = vunpack.c.l.b16 %v757
          %v790 = vunpack.c.l.b16 %v758
          %v791 = vunpack.c.l.b16 %v759
          %v792 = vpack.c.b16 %v777, %v776
          %v793 = vpack.c.b16 %v779, %v778
          %v794 = vpack.c.b16 %v781, %v780
          %v795 = vpack.c.b16 %v783, %v782
          %v796 = vpack.c.b16 %v785, %v784
          %v797 = vpack.c.b16 %v787, %v786
          %v798 = vpack.c.b16 %v789, %v788
          %v799 = vpack.c.b16 %v791, %v790
          %808 = vmatprep.subr.bf16.mxu0 0
          %809 = vmatpush1.bf16.msra.mxu0 %v799
          %810 = vmatprep.subr.bf16.mxu0 0
          %811 = vmatpush1.bf16.msra.mxu0 %v798
          %812 = vmatprep.subr.bf16.mxu0 0
          %813 = vmatpush1.bf16.msra.mxu0 %v797
          %814 = vmatprep.subr.bf16.mxu0 0
          %815 = vmatpush1.bf16.msra.mxu0 %v796
          %816 = vmatprep.subr.bf16.mxu0 0
          %817 = vmatpush1.bf16.msra.mxu0 %v795
          %818 = vmatprep.subr.bf16.mxu0 0
          %819 = vmatpush1.bf16.msra.mxu0 %v794
          %820 = vmatprep.subr.bf16.mxu0 0
          %821 = vmatpush1.bf16.msra.mxu0 %v793
          %822 = vmatprep.subr.bf16.mxu0 0
          %823 = vmatpush1.bf16.msra.mxu0 %v792
          %824 = vmatprep.subr.bf16.mxu0 0
          %825 = vmatpush2.bf16.msra.mxu0 0
          %826 = vmatprep.subr.bf16.mxu0 0
          %827 = vmatpush2.bf16.msra.mxu0 0
          %828 = vmatprep.subr.bf16.mxu0 0
          %829 = vmatpush2.bf16.msra.mxu0 0
          %830 = vmatprep.subr.bf16.mxu0 0
          %831 = vmatpush2.bf16.msra.mxu0 0
          %832 = vmatprep.subr.bf16.mxu0 0
          %833 = vmatpush2.bf16.msra.mxu0 0
          %834 = vmatprep.subr.bf16.mxu0 0
          %835 = vmatpush2.bf16.msra.mxu0 0
          %836 = vmatprep.subr.bf16.mxu0 0
          %837 = vmatpush2.bf16.msra.mxu0 0
          %838 = vmatprep.subr.bf16.mxu0 0
          %839 = vmatpush2.bf16.msra.mxu0 0
          %840 = vmatprep.mubr.bf16.mxu0 0
          %841 = vmatmul.mubr.bf16.gmra.mxu0 %v742
          %v842 = vpop.f32.mrf.mxu0
          %v843 = vadd.f32 0.0, %v842
          %v844 = vpop.f32.mrf.mxu0
          %v845 = vpop.f32.mrf.mxu0
          %v846 = vpop.f32.mrf.mxu0
          %847 = vdwg.mxu0
          %v864 = vunpack.c.l.b16 %v725
          %v865 = vunpack.c.l.b16 %v726
          %v866 = vunpack.c.l.b16 %v727
          %v867 = vunpack.c.l.b16 %v728
          %v868 = vunpack.c.l.b16 %v729
          %v869 = vunpack.c.l.b16 %v730
          %v870 = vunpack.c.l.b16 %v731
          %v871 = vunpack.c.l.b16 %v732
          %v872 = vunpack.c.l.b16 %v733
          %v873 = vunpack.c.l.b16 %v734
          %v874 = vunpack.c.l.b16 %v735
          %v875 = vunpack.c.l.b16 %v736
          %v876 = vunpack.c.l.b16 %v737
          %v877 = vunpack.c.l.b16 %v738
          %v878 = vunpack.c.l.b16 %v739
          %v879 = vunpack.c.l.b16 %v740
          %v880 = vpack.c.b16 %v865, %v864
          %v881 = vpack.c.b16 %v867, %v866
          %v882 = vpack.c.b16 %v869, %v868
          %v883 = vpack.c.b16 %v871, %v870
          %v884 = vpack.c.b16 %v873, %v872
          %v885 = vpack.c.b16 %v875, %v874
          %v886 = vpack.c.b16 %v877, %v876
          %v887 = vpack.c.b16 %v879, %v878
          %896 = vmatprep.subr.bf16.mxu0 0
          %897 = vmatpush1.bf16.msra.mxu0 %v887
          %898 = vmatprep.subr.bf16.mxu0 0
          %899 = vmatpush1.bf16.msra.mxu0 %v886
          %900 = vmatprep.subr.bf16.mxu0 0
          %901 = vmatpush1.bf16.msra.mxu0 %v885
          %902 = vmatprep.subr.bf16.mxu0 0
          %903 = vmatpush1.bf16.msra.mxu0 %v884
          %904 = vmatprep.subr.bf16.mxu0 0
          %905 = vmatpush1.bf16.msra.mxu0 %v883
          %906 = vmatprep.subr.bf16.mxu0 0
          %907 = vmatpush1.bf16.msra.mxu0 %v882
          %908 = vmatprep.subr.bf16.mxu0 0
          %909 = vmatpush1.bf16.msra.mxu0 %v881
          %910 = vmatprep.subr.bf16.mxu0 0
          %911 = vmatpush1.bf16.msra.mxu0 %v880
          %912 = vmatprep.subr.bf16.mxu0 0
          %913 = vmatpush2.bf16.msra.mxu0 0
          %914 = vmatprep.subr.bf16.mxu0 0
          %915 = vmatpush2.bf16.msra.mxu0 0
          %916 = vmatprep.subr.bf16.mxu0 0
          %917 = vmatpush2.bf16.msra.mxu0 0
          %918 = vmatprep.subr.bf16.mxu0 0
          %919 = vmatpush2.bf16.msra.mxu0 0
          %920 = vmatprep.subr.bf16.mxu0 0
          %921 = vmatpush2.bf16.msra.mxu0 0
          %922 = vmatprep.subr.bf16.mxu0 0
          %923 = vmatpush2.bf16.msra.mxu0 0
          %924 = vmatprep.subr.bf16.mxu0 0
          %925 = vmatpush2.bf16.msra.mxu0 0
          %926 = vmatprep.subr.bf16.mxu0 0
          %927 = vmatpush2.bf16.msra.mxu0 0
          %928 = vmatprep.mubr.bf16.mxu0 0
          %929 = vmatmul.mubr.bf16.gmra.mxu0 %v724
          %v930 = vpop.f32.mrf.mxu0
          %v931 = vadd.f32 %v843, %v930
          %v932 = vpop.f32.mrf.mxu0
          %v933 = vpop.f32.mrf.mxu0
          %v934 = vpop.f32.mrf.mxu0
          %935 = vdwg.mxu0
          %v936 = vld [vmem:[%s3] sm:$0x1]
          %v937 = vld [vmem:[#allocation9] sm:$0x1]
          %v938 = vrot.slane %v931, 4
          %v939 = vadd.f32 %v931, %v938
          %v940 = vrot.slane %v939, 2
          %v941 = vadd.f32 %v939, %v940
          %v942 = vrot.slane %v941, 1
          %v943 = vadd.f32 %v941, %v942
          %v944 = vmul.f32 %v943, 0.125
          %v945 = vmul.f32 %v931, %v931
          %v946 = vrot.slane %v945, 4
          %v947 = vadd.f32 %v945, %v946
          %v948 = vrot.slane %v947, 2
          %v949 = vadd.f32 %v947, %v948
          %v950 = vrot.slane %v949, 1
          %v951 = vadd.f32 %v949, %v950
          %v952 = vmul.f32 %v951, 0.125
          %v953 = vmul.f32 %v944, %v944
          %v954 = vsub.f32 %v952, %v953
          %v955 = vmax.f32 %v954, 0.0
          %v956 = vsub.f32 %v931, %v944
          %v958 = vlaneseq
          %v959 = vshrl.u32 %v958, 7
          %v960 = vsub.s32 0, %v959
          %v961 = vrot.slane %v936, %v960
          %v963 = vmul.f32 %v961, %v956
          %v964 = vadd.f32 %v955, 1e-05
          %v965 = vrsqrt.pop %v964
          %v966 = vmul.f32 %v963, %v965
          %v968 = vlaneseq
          %v969 = vshrl.u32 %v968, 7
          %v970 = vsub.s32 0, %v969
          %v971 = vrot.slane %v937, %v970
          %v973 = vadd.f32 %v966, %v971
          %v974 = vmax.f32 %v973, 0.0
          %975 = vst [vmem:[#allocation2] sm:$0xff] %v974
        $region116: #{tpu_custom_call.1} parent=79 // pred_fallthru
          _
        %v976 = vld [vmem:[#allocation2] sm:$0xff]
        %v977 = vld [vmem:[%s708] sm:$0x1]
        %v978 = vld [vmem:[%s711] sm:$0x1]
        %v979 = vrot.slane %v976, 4
        %v980 = vadd.f32 %v976, %v979
        %v981 = vrot.slane %v980, 2
        %v982 = vadd.f32 %v980, %v981
        %v983 = vrot.slane %v982, 1
        %v984 = vadd.f32 %v982, %v983
        %v985 = vmul.f32 %v984, 0.125
        %v986 = vmul.f32 %v976, %v976
        %v987 = vrot.slane %v986, 4
        %v988 = vadd.f32 %v986, %v987
        %v989 = vrot.slane %v988, 2
        %v990 = vadd.f32 %v988, %v989
        %v991 = vrot.slane %v990, 1
        %v992 = vadd.f32 %v990, %v991
        %v993 = vmul.f32 %v992, 0.125
        %v994 = vmul.f32 %v985, %v985
        %v995 = vsub.f32 %v993, %v994
        %v996 = vmax.f32 %v995, 0.0
        %v997 = vsub.f32 %v976, %v985
        %v999 = vlaneseq
        %v1000 = vshrl.u32 %v999, 7
        %v1001 = vsub.s32 0, %v1000
        %v1002 = vrot.slane %v977, %v1001
        %v1004 = vmul.f32 %v1002, %v997
        %v1005 = vadd.f32 %v996, 1e-05
        %v1006 = vrsqrt.pop %v1005
        %v1007 = vmul.f32 %v1004, %v1006
        %v1009 = vlaneseq
        %v1010 = vshrl.u32 %v1009, 7
        %v1011 = vsub.s32 0, %v1010
        %v1012 = vrot.slane %v978, %v1011
        %v1014 = vadd.f32 %v1007, %v1012
        %v1015 = vpack.c.bf16 %v1014, %v1014
        %v1016 = vld [vmem:[%s610] sm:$0xf]
        %v1017 = vld [vmem:[%s610 + $0x4] sm:$0xf]
        %v1018 = vld [vmem:[%s610 + $0x8] sm:$0xf]
        %v1019 = vld [vmem:[%s610 + $0xc] sm:$0xf]
        %v1020 = vld [vmem:[%s610 + $0x10] sm:$0xf]
        %v1021 = vld [vmem:[%s610 + $0x14] sm:$0xf]
        %v1022 = vld [vmem:[%s610 + $0x18] sm:$0xf]
        %v1023 = vld [vmem:[%s610 + $0x1c] sm:$0xf]
        %v1024 = vld [vmem:[%s610 + $0x20] sm:$0xf]
        %v1025 = vld [vmem:[%s610 + $0x24] sm:$0xf]
        %v1026 = vld [vmem:[%s610 + $0x28] sm:$0xf]
        %v1027 = vld [vmem:[%s610 + $0x2c] sm:$0xf]
        %v1028 = vld [vmem:[%s610 + $0x30] sm:$0xf]
        %v1029 = vld [vmem:[%s610 + $0x34] sm:$0xf]
        %v1030 = vld [vmem:[%s610 + $0x38] sm:$0xf]
        %v1031 = vld [vmem:[%s610 + $0x3c] sm:$0xf]
        %v1048 = vunpack.c.l.b16 %v1016
        %v1049 = vunpack.c.l.b16 %v1017
        %v1050 = vunpack.c.l.b16 %v1018
        %v1051 = vunpack.c.l.b16 %v1019
        %v1052 = vunpack.c.l.b16 %v1020
        %v1053 = vunpack.c.l.b16 %v1021
        %v1054 = vunpack.c.l.b16 %v1022
        %v1055 = vunpack.c.l.b16 %v1023
        %v1056 = vunpack.c.l.b16 %v1024
        %v1057 = vunpack.c.l.b16 %v1025
        %v1058 = vunpack.c.l.b16 %v1026
        %v1059 = vunpack.c.l.b16 %v1027
        %v1060 = vunpack.c.l.b16 %v1028
        %v1061 = vunpack.c.l.b16 %v1029
        %v1062 = vunpack.c.l.b16 %v1030
        %v1063 = vunpack.c.l.b16 %v1031
        %v1064 = vpack.c.b16 %v1049, %v1048
        %v1065 = vpack.c.b16 %v1051, %v1050
        %v1066 = vpack.c.b16 %v1053, %v1052
        %v1067 = vpack.c.b16 %v1055, %v1054
        %v1068 = vpack.c.b16 %v1057, %v1056
        %v1069 = vpack.c.b16 %v1059, %v1058
        %v1070 = vpack.c.b16 %v1061, %v1060
        %v1071 = vpack.c.b16 %v1063, %v1062
        %1080 = vmatprep.subr.bf16.mxu0 0
        %1081 = vmatpush1.bf16.msra.mxu0 %v1071
        %1082 = vmatprep.subr.bf16.mxu0 0
        %1083 = vmatpush1.bf16.msra.mxu0 %v1070
        %1084 = vmatprep.subr.bf16.mxu0 0
        %1085 = vmatpush1.bf16.msra.mxu0 %v1069
        %1086 = vmatprep.subr.bf16.mxu0 0
        %1087 = vmatpush1.bf16.msra.mxu0 %v1068
        %1088 = vmatprep.subr.bf16.mxu0 0
        %1089 = vmatpush1.bf16.msra.mxu0 %v1067
        %1090 = vmatprep.subr.bf16.mxu0 0
        %1091 = vmatpush1.bf16.msra.mxu0 %v1066
        %1092 = vmatprep.subr.bf16.mxu0 0
        %1093 = vmatpush1.bf16.msra.mxu0 %v1065
        %1094 = vmatprep.subr.bf16.mxu0 0
        %1095 = vmatpush1.bf16.msra.mxu0 %v1064
        %1096 = vmatprep.subr.bf16.mxu0 0
        %1097 = vmatpush2.bf16.msra.mxu0 0
        %1098 = vmatprep.subr.bf16.mxu0 0
        %1099 = vmatpush2.bf16.msra.mxu0 0
        %1100 = vmatprep.subr.bf16.mxu0 0
        %1101 = vmatpush2.bf16.msra.mxu0 0
        %1102 = vmatprep.subr.bf16.mxu0 0
        %1103 = vmatpush2.bf16.msra.mxu0 0
        %1104 = vmatprep.subr.bf16.mxu0 0
        %1105 = vmatpush2.bf16.msra.mxu0 0
        %1106 = vmatprep.subr.bf16.mxu0 0
        %1107 = vmatpush2.bf16.msra.mxu0 0
        %1108 = vmatprep.subr.bf16.mxu0 0
        %1109 = vmatpush2.bf16.msra.mxu0 0
        %1110 = vmatprep.subr.bf16.mxu0 0
        %1111 = vmatpush2.bf16.msra.mxu0 0
        %1112 = vmatprep.mubr.bf16.mxu0 0
        %1113 = vmatmul.mubr.bf16.gmra.mxu0 %v1015
        %v1114 = vpop.f32.mrf.mxu0
        %v1115 = vadd.f32 0.0, %v1114
        %v1116 = vpop.f32.mrf.mxu0
        %v1117 = vpop.f32.mrf.mxu0
        %v1118 = vpop.f32.mrf.mxu0
        %1119 = vdwg.mxu0
        %v1120 = vmax.f32 %v1115, 0.0
        %v1121 = vpack.c.bf16 %v1120, %v1120
        %v1122 = vld [vmem:[%s619] sm:$0xf]
        %v1123 = vld [vmem:[%s619 + $0x4] sm:$0xf]
        %v1124 = vld [vmem:[%s619 + $0x8] sm:$0xf]
        %v1125 = vld [vmem:[%s619 + $0xc] sm:$0xf]
        %v1126 = vld [vmem:[%s619 + $0x10] sm:$0xf]
        %v1127 = vld [vmem:[%s619 + $0x14] sm:$0xf]
        %v1128 = vld [vmem:[%s619 + $0x18] sm:$0xf]
        %v1129 = vld [vmem:[%s619 + $0x1c] sm:$0xf]
        %v1130 = vld [vmem:[%s619 + $0x20] sm:$0xf]
        %v1131 = vld [vmem:[%s619 + $0x24] sm:$0xf]
        %v1132 = vld [vmem:[%s619 + $0x28] sm:$0xf]
        %v1133 = vld [vmem:[%s619 + $0x2c] sm:$0xf]
        %v1134 = vld [vmem:[%s619 + $0x30] sm:$0xf]
        %v1135 = vld [vmem:[%s619 + $0x34] sm:$0xf]
        %v1136 = vld [vmem:[%s619 + $0x38] sm:$0xf]
        %v1137 = vld [vmem:[%s619 + $0x3c] sm:$0xf]
        %v1154 = vunpack.c.l.b16 %v1122
        %v1155 = vunpack.c.l.b16 %v1123
        %v1156 = vunpack.c.l.b16 %v1124
        %v1157 = vunpack.c.l.b16 %v1125
        %v1158 = vunpack.c.l.b16 %v1126
        %v1159 = vunpack.c.l.b16 %v1127
        %v1160 = vunpack.c.l.b16 %v1128
        %v1161 = vunpack.c.l.b16 %v1129
        %v1162 = vunpack.c.l.b16 %v1130
        %v1163 = vunpack.c.l.b16 %v1131
        %v1164 = vunpack.c.l.b16 %v1132
        %v1165 = vunpack.c.l.b16 %v1133
        %v1166 = vunpack.c.l.b16 %v1134
        %v1167 = vunpack.c.l.b16 %v1135
        %v1168 = vunpack.c.l.b16 %v1136
        %v1169 = vunpack.c.l.b16 %v1137
        %v1170 = vpack.c.b16 %v1155, %v1154
        %v1171 = vpack.c.b16 %v1157, %v1156
        %v1172 = vpack.c.b16 %v1159, %v1158
        %v1173 = vpack.c.b16 %v1161, %v1160
        %v1174 = vpack.c.b16 %v1163, %v1162
        %v1175 = vpack.c.b16 %v1165, %v1164
        %v1176 = vpack.c.b16 %v1167, %v1166
        %v1177 = vpack.c.b16 %v1169, %v1168
        %1186 = vmatprep.subr.bf16.mxu0 0
        %1187 = vmatpush1.bf16.msra.mxu0 %v1177
        %1188 = vmatprep.subr.bf16.mxu0 0
        %1189 = vmatpush1.bf16.msra.mxu0 %v1176
        %1190 = vmatprep.subr.bf16.mxu0 0
        %1191 = vmatpush1.bf16.msra.mxu0 %v1175
        %1192 = vmatprep.subr.bf16.mxu0 0
        %1193 = vmatpush1.bf16.msra.mxu0 %v1174
        %1194 = vmatprep.subr.bf16.mxu0 0
        %1195 = vmatpush1.bf16.msra.mxu0 %v1173
        %1196 = vmatprep.subr.bf16.mxu0 0
        %1197 = vmatpush1.bf16.msra.mxu0 %v1172
        %1198 = vmatprep.subr.bf16.mxu0 0
        %1199 = vmatpush1.bf16.msra.mxu0 %v1171
        %1200 = vmatprep.subr.bf16.mxu0 0
        %1201 = vmatpush1.bf16.msra.mxu0 %v1170
        %1202 = vmatprep.subr.bf16.mxu0 0
        %1203 = vmatpush2.bf16.msra.mxu0 0
        %1204 = vmatprep.subr.bf16.mxu0 0
        %1205 = vmatpush2.bf16.msra.mxu0 0
        %1206 = vmatprep.subr.bf16.mxu0 0
        %1207 = vmatpush2.bf16.msra.mxu0 0
        %1208 = vmatprep.subr.bf16.mxu0 0
        %1209 = vmatpush2.bf16.msra.mxu0 0
        %1210 = vmatprep.subr.bf16.mxu0 0
        %1211 = vmatpush2.bf16.msra.mxu0 0
        %1212 = vmatprep.subr.bf16.mxu0 0
        %1213 = vmatpush2.bf16.msra.mxu0 0
        %1214 = vmatprep.subr.bf16.mxu0 0
        %1215 = vmatpush2.bf16.msra.mxu0 0
        %1216 = vmatprep.subr.bf16.mxu0 0
        %1217 = vmatpush2.bf16.msra.mxu0 0
        %1218 = vmatprep.mubr.bf16.mxu0 0
        %1219 = vmatmul.mubr.bf16.gmra.mxu0 %v1121
        %v1220 = vpop.f32.mrf.mxu0
        %v1221 = vadd.f32 0.0, %v1220
        %v1222 = vpop.f32.mrf.mxu0
        %v1223 = vpop.f32.mrf.mxu0
        %v1224 = vpop.f32.mrf.mxu0
        %1225 = vdwg.mxu0
        %v1226 = vadd.f32 %v976, %v1221
        %v1227 = vld [vmem:[%s714] sm:$0x1]
        %v1228 = vld [vmem:[%s717] sm:$0x1]
        %v1229 = vrot.slane %v1226, 4
        %v1230 = vadd.f32 %v1226, %v1229
        %v1231 = vrot.slane %v1230, 2
        %v1232 = vadd.f32 %v1230, %v1231
        %v1233 = vrot.slane %v1232, 1
        %v1234 = vadd.f32 %v1232, %v1233
        %v1235 = vmul.f32 %v1234, 0.125
        %v1236 = vmul.f32 %v1226, %v1226
        %v1237 = vrot.slane %v1236, 4
        %v1238 = vadd.f32 %v1236, %v1237
        %v1239 = vrot.slane %v1238, 2
        %v1240 = vadd.f32 %v1238, %v1239
        %v1241 = vrot.slane %v1240, 1
        %v1242 = vadd.f32 %v1240, %v1241
        %v1243 = vmul.f32 %v1242, 0.125
        %v1244 = vmul.f32 %v1235, %v1235
        %v1245 = vsub.f32 %v1243, %v1244
        %v1246 = vmax.f32 %v1245, 0.0
        %v1247 = vsub.f32 %v1226, %v1235
        %v1249 = vlaneseq
        %v1250 = vshrl.u32 %v1249, 7
        %v1251 = vsub.s32 0, %v1250
        %v1252 = vrot.slane %v1227, %v1251
        %v1254 = vmul.f32 %v1252, %v1247
        %v1255 = vadd.f32 %v1246, 1e-05
        %v1256 = vrsqrt.pop %v1255
        %v1257 = vmul.f32 %v1254, %v1256
        %v1259 = vlaneseq
        %v1260 = vshrl.u32 %v1259, 7
        %v1261 = vsub.s32 0, %v1260
        %v1262 = vrot.slane %v1228, %v1261
        %v1264 = vadd.f32 %v1257, %v1262
        %v1265 = vpack.c.bf16 %v1264, %v1264
        %v1266 = vld [vmem:[%s628] sm:$0xf]
        %v1267 = vld [vmem:[%s628 + $0x4] sm:$0xf]
        %v1268 = vld [vmem:[%s628 + $0x8] sm:$0xf]
        %v1269 = vld [vmem:[%s628 + $0xc] sm:$0xf]
        %v1270 = vld [vmem:[%s628 + $0x10] sm:$0xf]
        %v1271 = vld [vmem:[%s628 + $0x14] sm:$0xf]
        %v1272 = vld [vmem:[%s628 + $0x18] sm:$0xf]
        %v1273 = vld [vmem:[%s628 + $0x1c] sm:$0xf]
        %v1274 = vld [vmem:[%s628 + $0x20] sm:$0xf]
        %v1275 = vld [vmem:[%s628 + $0x24] sm:$0xf]
        %v1276 = vld [vmem:[%s628 + $0x28] sm:$0xf]
        %v1277 = vld [vmem:[%s628 + $0x2c] sm:$0xf]
        %v1278 = vld [vmem:[%s628 + $0x30] sm:$0xf]
        %v1279 = vld [vmem:[%s628 + $0x34] sm:$0xf]
        %v1280 = vld [vmem:[%s628 + $0x38] sm:$0xf]
        %v1281 = vld [vmem:[%s628 + $0x3c] sm:$0xf]
        %v1298 = vunpack.c.l.b16 %v1266
        %v1299 = vunpack.c.l.b16 %v1267
        %v1300 = vunpack.c.l.b16 %v1268
        %v1301 = vunpack.c.l.b16 %v1269
        %v1302 = vunpack.c.l.b16 %v1270
        %v1303 = vunpack.c.l.b16 %v1271
        %v1304 = vunpack.c.l.b16 %v1272
        %v1305 = vunpack.c.l.b16 %v1273
        %v1306 = vunpack.c.l.b16 %v1274
        %v1307 = vunpack.c.l.b16 %v1275
        %v1308 = vunpack.c.l.b16 %v1276
        %v1309 = vunpack.c.l.b16 %v1277
        %v1310 = vunpack.c.l.b16 %v1278
        %v1311 = vunpack.c.l.b16 %v1279
        %v1312 = vunpack.c.l.b16 %v1280
        %v1313 = vunpack.c.l.b16 %v1281
        %v1314 = vpack.c.b16 %v1299, %v1298
        %v1315 = vpack.c.b16 %v1301, %v1300
        %v1316 = vpack.c.b16 %v1303, %v1302
        %v1317 = vpack.c.b16 %v1305, %v1304
        %v1318 = vpack.c.b16 %v1307, %v1306
        %v1319 = vpack.c.b16 %v1309, %v1308
        %v1320 = vpack.c.b16 %v1311, %v1310
        %v1321 = vpack.c.b16 %v1313, %v1312
        %1330 = vmatprep.subr.bf16.mxu0 0
        %1331 = vmatpush1.bf16.msra.mxu0 %v1321
        %1332 = vmatprep.subr.bf16.mxu0 0
        %1333 = vmatpush1.bf16.msra.mxu0 %v1320
        %1334 = vmatprep.subr.bf16.mxu0 0
        %1335 = vmatpush1.bf16.msra.mxu0 %v1319
        %1336 = vmatprep.subr.bf16.mxu0 0
        %1337 = vmatpush1.bf16.msra.mxu0 %v1318
        %1338 = vmatprep.subr.bf16.mxu0 0
        %1339 = vmatpush1.bf16.msra.mxu0 %v1317
        %1340 = vmatprep.subr.bf16.mxu0 0
        %1341 = vmatpush1.bf16.msra.mxu0 %v1316
        %1342 = vmatprep.subr.bf16.mxu0 0
        %1343 = vmatpush1.bf16.msra.mxu0 %v1315
        %1344 = vmatprep.subr.bf16.mxu0 0
        %1345 = vmatpush1.bf16.msra.mxu0 %v1314
        %1346 = vmatprep.subr.bf16.mxu0 0
        %1347 = vmatpush2.bf16.msra.mxu0 0
        %1348 = vmatprep.subr.bf16.mxu0 0
        %1349 = vmatpush2.bf16.msra.mxu0 0
        %1350 = vmatprep.subr.bf16.mxu0 0
        %1351 = vmatpush2.bf16.msra.mxu0 0
        %1352 = vmatprep.subr.bf16.mxu0 0
        %1353 = vmatpush2.bf16.msra.mxu0 0
        %1354 = vmatprep.subr.bf16.mxu0 0
        %1355 = vmatpush2.bf16.msra.mxu0 0
        %1356 = vmatprep.subr.bf16.mxu0 0
        %1357 = vmatpush2.bf16.msra.mxu0 0
        %1358 = vmatprep.subr.bf16.mxu0 0
        %1359 = vmatpush2.bf16.msra.mxu0 0
        %1360 = vmatprep.subr.bf16.mxu0 0
        %1361 = vmatpush2.bf16.msra.mxu0 0
        %1362 = vmatprep.mubr.bf16.mxu0 0
        %1363 = vmatmul.mubr.bf16.gmra.mxu0 %v1265
        %v1364 = vpop.f32.mrf.mxu0
        %v1365 = vadd.f32 0.0, %v1364
        %v1366 = vpop.f32.mrf.mxu0
        %v1367 = vpop.f32.mrf.mxu0
        %v1368 = vpop.f32.mrf.mxu0
        %1369 = vdwg.mxu0
        %v1370 = vmax.f32 %v1365, 0.0
        %v1371 = vpack.c.bf16 %v1370, %v1370
        %v1372 = vld [vmem:[%s637] sm:$0xf]
        %v1373 = vld [vmem:[%s637 + $0x4] sm:$0xf]
        %v1374 = vld [vmem:[%s637 + $0x8] sm:$0xf]
        %v1375 = vld [vmem:[%s637 + $0xc] sm:$0xf]
        %v1376 = vld [vmem:[%s637 + $0x10] sm:$0xf]
        %v1377 = vld [vmem:[%s637 + $0x14] sm:$0xf]
        %v1378 = vld [vmem:[%s637 + $0x18] sm:$0xf]
        %v1379 = vld [vmem:[%s637 + $0x1c] sm:$0xf]
        %v1380 = vld [vmem:[%s637 + $0x20] sm:$0xf]
        %v1381 = vld [vmem:[%s637 + $0x24] sm:$0xf]
        %v1382 = vld [vmem:[%s637 + $0x28] sm:$0xf]
        %v1383 = vld [vmem:[%s637 + $0x2c] sm:$0xf]
        %v1384 = vld [vmem:[%s637 + $0x30] sm:$0xf]
        %v1385 = vld [vmem:[%s637 + $0x34] sm:$0xf]
        %v1386 = vld [vmem:[%s637 + $0x38] sm:$0xf]
        %v1387 = vld [vmem:[%s637 + $0x3c] sm:$0xf]
        %v1404 = vunpack.c.l.b16 %v1372
        %v1405 = vunpack.c.l.b16 %v1373
        %v1406 = vunpack.c.l.b16 %v1374
        %v1407 = vunpack.c.l.b16 %v1375
        %v1408 = vunpack.c.l.b16 %v1376
        %v1409 = vunpack.c.l.b16 %v1377
        %v1410 = vunpack.c.l.b16 %v1378
        %v1411 = vunpack.c.l.b16 %v1379
        %v1412 = vunpack.c.l.b16 %v1380
        %v1413 = vunpack.c.l.b16 %v1381
        %v1414 = vunpack.c.l.b16 %v1382
        %v1415 = vunpack.c.l.b16 %v1383
        %v1416 = vunpack.c.l.b16 %v1384
        %v1417 = vunpack.c.l.b16 %v1385
        %v1418 = vunpack.c.l.b16 %v1386
        %v1419 = vunpack.c.l.b16 %v1387
        %v1420 = vpack.c.b16 %v1405, %v1404
        %v1421 = vpack.c.b16 %v1407, %v1406
        %v1422 = vpack.c.b16 %v1409, %v1408
        %v1423 = vpack.c.b16 %v1411, %v1410
        %v1424 = vpack.c.b16 %v1413, %v1412
        %v1425 = vpack.c.b16 %v1415, %v1414
        %v1426 = vpack.c.b16 %v1417, %v1416
        %v1427 = vpack.c.b16 %v1419, %v1418
        %1436 = vmatprep.subr.bf16.mxu0 0
        %1437 = vmatpush1.bf16.msra.mxu0 %v1427
        %1438 = vmatprep.subr.bf16.mxu0 0
        %1439 = vmatpush1.bf16.msra.mxu0 %v1426
        %1440 = vmatprep.subr.bf16.mxu0 0
        %1441 = vmatpush1.bf16.msra.mxu0 %v1425
        %1442 = vmatprep.subr.bf16.mxu0 0
        %1443 = vmatpush1.bf16.msra.mxu0 %v1424
        %1444 = vmatprep.subr.bf16.mxu0 0
        %1445 = vmatpush1.bf16.msra.mxu0 %v1423
        %1446 = vmatprep.subr.bf16.mxu0 0
        %1447 = vmatpush1.bf16.msra.mxu0 %v1422
        %1448 = vmatprep.subr.bf16.mxu0 0
        %1449 = vmatpush1.bf16.msra.mxu0 %v1421
        %1450 = vmatprep.subr.bf16.mxu0 0
        %1451 = vmatpush1.bf16.msra.mxu0 %v1420
        %1452 = vmatprep.subr.bf16.mxu0 0
        %1453 = vmatpush2.bf16.msra.mxu0 0
        %1454 = vmatprep.subr.bf16.mxu0 0
        %1455 = vmatpush2.bf16.msra.mxu0 0
        %1456 = vmatprep.subr.bf16.mxu0 0
        %1457 = vmatpush2.bf16.msra.mxu0 0
        %1458 = vmatprep.subr.bf16.mxu0 0
        %1459 = vmatpush2.bf16.msra.mxu0 0
        %1460 = vmatprep.subr.bf16.mxu0 0
        %1461 = vmatpush2.bf16.msra.mxu0 0
        %1462 = vmatprep.subr.bf16.mxu0 0
        %1463 = vmatpush2.bf16.msra.mxu0 0
        %1464 = vmatprep.subr.bf16.mxu0 0
        %1465 = vmatpush2.bf16.msra.mxu0 0
        %1466 = vmatprep.subr.bf16.mxu0 0
        %1467 = vmatpush2.bf16.msra.mxu0 0
        %1468 = vmatprep.mubr.bf16.mxu0 0
        %1469 = vmatmul.mubr.bf16.gmra.mxu0 %v1371
        %v1470 = vpop.f32.mrf.mxu0
        %v1471 = vadd.f32 0.0, %v1470
        %v1472 = vpop.f32.mrf.mxu0
        %v1473 = vpop.f32.mrf.mxu0
        %v1474 = vpop.f32.mrf.mxu0
        %1475 = vdwg.mxu0
        %v1476 = vadd.f32 %v1226, %v1471
        %1477 = vst [vmem:[#allocation2] sm:$0xff] %v1476
        %p1478 = scmp.eq.s32.totalorder %s30, 1
        // Predicated region
        $region117: #{tpu_custom_call.1} parent=79 // pred_check
          %p1479 = pneg %p1478
        $region118: #{tpu_custom_call.1} parent=79 // pred_check_branch
          %1481 = sbr.rel (%p1479) target = $region120
        $region119: #{tpu_custom_call.1} parent=79 // pred_region
          %v1482 = vld [vmem:[#allocation2] sm:$0xff]
          %v1483 = vld [vmem:[%s13] sm:$0x1]
          %v1484 = vld [vmem:[%s14] sm:$0x1]
          %v1485 = vrot.slane %v1482, 4
          %v1486 = vadd.f32 %v1482, %v1485
          %v1487 = vrot.slane %v1486, 2
          %v1488 = vadd.f32 %v1486, %v1487
          %v1489 = vrot.slane %v1488, 1
          %v1490 = vadd.f32 %v1488, %v1489
          %v1491 = vmul.f32 %v1490, 0.125
          %v1492 = vmul.f32 %v1482, %v1482
          %v1493 = vrot.slane %v1492, 4
          %v1494 = vadd.f32 %v1492, %v1493
          %v1495 = vrot.slane %v1494, 2
          %v1496 = vadd.f32 %v1494, %v1495
          %v1497 = vrot.slane %v1496, 1
          %v1498 = vadd.f32 %v1496, %v1497
          %v1499 = vmul.f32 %v1498, 0.125
          %v1500 = vmul.f32 %v1491, %v1491
          %v1501 = vsub.f32 %v1499, %v1500
          %v1502 = vmax.f32 %v1501, 0.0
          %v1503 = vsub.f32 %v1482, %v1491
          %v1505 = vlaneseq
          %v1506 = vshrl.u32 %v1505, 7
          %v1507 = vsub.s32 0, %v1506
          %v1508 = vrot.slane %v1483, %v1507
          %v1510 = vmul.f32 %v1508, %v1503
          %v1511 = vadd.f32 %v1502, 1e-05
          %v1512 = vrsqrt.pop %v1511
          %v1513 = vmul.f32 %v1510, %v1512
          %v1515 = vlaneseq
          %v1516 = vshrl.u32 %v1515, 7
          %v1517 = vsub.s32 0, %v1516
          %v1518 = vrot.slane %v1484, %v1517
          %v1520 = vadd.f32 %v1513, %v1518
          %1521 = vst [vmem:[#allocation15] sm:$0xff] %v1520
        $region120: #{tpu_custom_call.1} parent=79 // pred_fallthru
          _
        // Predicated region
        $region121: #{tpu_custom_call.1} parent=79 // pred_check
          %p1522 = pneg %p398
        $region122: #{tpu_custom_call.1} parent=79 // pred_check_branch
          %1524 = sbr.rel (%p1522) target = $region124
        $region123: #{tpu_custom_call.1} parent=79 // pred_region
          %s1526 = ssub.s32 128, 128
          %1527 = vsyncadd [#allocation5], %s1526
          %s1529 = sshll.u32 [#allocation15], 4
          %s1530 = int_to_ptr.vmem [resolvable:$true] %s1529
          %1532 = dma.vmem_to_hbm [thread:$0]  %s1530, 128, %s15, [#allocation5]
        $region124: #{tpu_custom_call.1} parent=79 // pred_fallthru
          _
        // Predicated region
        $region125: #{tpu_custom_call.1} parent=79 // pred_check
          %p1533 = pneg %p398
        $region126: #{tpu_custom_call.1} parent=79 // pred_check_branch
          %1535 = sbr.rel (%p1533) target = $region128
        $region127: #{tpu_custom_call.1} parent=79 // pred_region
          %1536 = dma.done [#allocation5], 128
        $region128: #{tpu_custom_call.1} parent=79 // pred_fallthru
          _
      $region80: #{tpu_custom_call.1} parent=5 // pred_fallthru
        _
      %p1537 = scmp.le.s32.totalorder 2, %s25
      // Predicated region
      $region129: #{tpu_custom_call.1} parent=5 // pred_check
        %p1538 = pneg %p1537
      $region130: #{tpu_custom_call.1} parent=5 // pred_check_branch
        %1540 = sbr.rel (%p1538) target = $region132
      $region131: #{tpu_custom_call.1} parent=5 // pred_region
        %s1541 = ssub.s32 %s25, 2
      $region132: #{tpu_custom_call.1} parent=5 // pred_fallthru
        _
    $region6: #{tpu_custom_call.1} parent=1 // loop_footer
      %s29 = sadd.s32 1, %s25
    $region7: #{tpu_custom_call.1} parent=1 // loop_footer_branch
      %24 = sbr.rel target = $region3
    $region8: #{tpu_custom_call.1} parent=1 // loop_exit
      _
    %1542 = vsyncpa [#allocation4], 1
    %s1543 = scalar_lea.sflag [#allocation4], 1
    %1544 = vsyncpa %s1543, 1
    %1545 = vsyncpa [#allocation7], 1
    %1546 = vsyncpa [#allocation10], 1
    %1547 = vsyncpa [#allocation5], 1
    %s1548 = scalar_lea.sflag [#allocation5], 1
    %1549 = vsyncpa %s1548, 1

</llo_original>
